<compile_context>
chip_gen: v7x
topology: tpu7x:2x2x1
jax: 0.10.0
libtpu: 0.0.40
codegen_flags: <defaults>
</compile_context>

<pallas_src>
import jax
import jax.numpy as jnp
from jax import lax
from jax.experimental import pallas as pl
from jax.experimental.pallas import tpu as pltpu

LATENT_DIM = 4
OBS_DIM = 2
NHIDDEN = 25
BATCH = 2
SEQ = 8

HP = 128  # hidden padded to one lane tile


def recognition_rnn_kernel(x_ref, wi_ref, whh_ref, misc_ref, out_ref):
    # x_ref:    (T*Bp, D+1)   inputs, time-major, ones column for folded biases
    # wi_ref:   (D+1, 3*Hp)   [W_ir|W_iz|W_in] per gate, padded to 128 lanes each;
    #                         last row = [b_ir+b_hr | b_iz+b_hz | b_in]
    # whh_ref:  (Hp, 3*Hp)    [W_hr|W_hz|W_hn] padded per gate
    # misc_ref: (Hp+8, 128)   rows 0:Hp = W_lin^T padded, row Hp = b_hn, row Hp+1 = b_lin
    # out_ref:  (Bp, 128)     lane-dense padded output
    hp = whh_ref.shape[0]
    bp = out_ref.shape[0]
    t_total = x_ref.shape[0] // bp

    # Hoisted input-side compute: every timestep's gi in a single MXU op.
    gi_all = jnp.dot(x_ref[...], wi_ref[...],
                     preferred_element_type=jnp.float32)          # (T*Bp, 3*Hp)

    whh = whh_ref[...]                                            # (Hp, 3*Hp)
    bhn = misc_ref[hp:hp + 1, :]                                  # (1, Hp)

    h = jnp.zeros((bp, hp), dtype=jnp.float32)
    for t in range(t_total):                                      # static, fully unrolled
        gi = gi_all[t * bp:(t + 1) * bp, :]                       # 8-row aligned slice
        gh = jnp.dot(h, whh, preferred_element_type=jnp.float32)  # (Bp, 3*Hp), one matmul
        r = jax.nn.sigmoid(gi[:, 0:hp] + gh[:, 0:hp])
        z = jax.nn.sigmoid(gi[:, hp:2 * hp] + gh[:, hp:2 * hp])
        n = jnp.tanh(gi[:, 2 * hp:3 * hp] + r * (gh[:, 2 * hp:3 * hp] + bhn))
        h = (1.0 - z) * n + z * h

    w_lin = misc_ref[0:hp, :]                                     # (Hp, 128)
    b_lin = misc_ref[hp + 1:hp + 2, :]                            # (1, 128)
    out_ref[...] = jnp.dot(h, w_lin, preferred_element_type=jnp.float32) + b_lin


def init_params(key, latent_dim=LATENT_DIM, obs_dim=OBS_DIM, nhidden=NHIDDEN):
    """Deterministic init mirroring PyTorch's packed GRU/Linear parameter shapes."""
    ks = jax.random.split(key, 6)
    k = 1.0 / jnp.sqrt(jnp.float32(nhidden))
    # PyTorch packed layout, gate order (r, z, n):
    w_ih = jax.random.uniform(ks[0], (3 * nhidden, obs_dim), jnp.float32, -k, k)
    w_hh = jax.random.uniform(ks[1], (3 * nhidden, nhidden), jnp.float32, -k, k)
    b_ih = jax.random.uniform(ks[2], (3 * nhidden,), jnp.float32, -k, k)
    b_hh = jax.random.uniform(ks[3], (3 * nhidden,), jnp.float32, -k, k)
    kl = 1.0 / jnp.sqrt(jnp.float32(nhidden))
    w_lin = jax.random.uniform(ks[4], (latent_dim, nhidden), jnp.float32, -kl, kl)
    b_lin = jax.random.uniform(ks[5], (latent_dim,), jnp.float32, -kl, kl)
    return dict(w_ih=w_ih, w_hh=w_hh, b_ih=b_ih, b_hh=b_hh,
                w_lin=w_lin, b_lin=b_lin)


def _pack_params(params, hp=HP):
    """Pack GRU + head weights into 3 lane-dense, zero-padded blocks."""
    w_ih, w_hh = params["w_ih"], params["w_hh"]        # (3H, D), (3H, H)
    b_ih, b_hh = params["b_ih"], params["b_hh"]        # (3H,), (3H,)
    latent_dim, H = params["w_lin"].shape
    D = w_ih.shape[1]

    def pad_lanes(m):
        return jnp.pad(m, ((0, 0), (0, hp - m.shape[1])))

    # ---- input block: (D+1, 3*Hp) ----
    wir, wiz, win = (pad_lanes(w_ih[0:H].T),
                     pad_lanes(w_ih[H:2 * H].T),
                     pad_lanes(w_ih[2 * H:3 * H].T))          # each (D, Hp)
    br = pad_lanes((b_ih[0:H] + b_hh[0:H])[None, :])          # sigmoid gates: fold b_ih+b_hh
    bz = pad_lanes((b_ih[H:2 * H] + b_hh[H:2 * H])[None, :])
    bn = pad_lanes(b_ih[2 * H:3 * H][None, :])                # only b_in; b_hn scaled by r
    wi_packed = jnp.concatenate(
        [jnp.concatenate([wir, wiz, win], axis=1),
         jnp.concatenate([br, bz, bn], axis=1)], axis=0)      # (D+1, 3*Hp)

    # ---- hidden block: (Hp, 3*Hp), zero-padded per gate ----
    def pad_hh(m):  # m: (H, H) gate block of w_hh
        return jnp.pad(m.T, ((0, hp - H), (0, hp - H)))
    whh_packed = jnp.concatenate(
        [pad_hh(w_hh[0:H]), pad_hh(w_hh[H:2 * H]), pad_hh(w_hh[2 * H:3 * H])], axis=1)

    # ---- misc block: (Hp+8, 128): W_lin^T | b_hn | b_lin | zero pad ----
    w_lin_pad = jnp.pad(params["w_lin"].T, ((0, hp - H), (0, 128 - latent_dim)))  # (Hp, 128)
    bhn_pad = jnp.pad(b_hh[2 * H:3 * H][None, :], ((0, 0), (0, hp - H)))          # (1, 128)
    b_lin_pad = jnp.pad(params["b_lin"][None, :], ((0, 0), (0, 128 - latent_dim)))
    misc = jnp.concatenate(
        [w_lin_pad, bhn_pad, b_lin_pad, jnp.zeros((6, 128), jnp.float32)], axis=0)

    return wi_packed, whh_packed, misc, D


@jax.jit
def recognition_rnn_forward(x, params):
    """x: (B, T, obs_dim), batch-first like PyTorch nn.GRU(batch_first=True)."""
    B, T, D = x.shape
    latent_dim = params["w_lin"].shape[0]
    BP = ((B + 7) // 8) * 8                                     # pad batch to 8 sublanes

    wi_packed, whh_packed, misc, _ = _pack_params(params)

    # Time-major, ones column (folds biases into the hoisted input matmul),
    # batch padded with zeros (padded rows are discarded after the kernel).
    x_tm = jnp.transpose(x, (1, 0, 2)).astype(jnp.float32)      # (T, B, D)
    x_aug = jnp.concatenate([x_tm, jnp.ones((T, B, 1), jnp.float32)], axis=-1)
    x_aug = jnp.pad(x_aug, ((0, 0), (0, BP - B), (0, 0)))       # (T, BP, D+1)
    x_flat = x_aug.reshape(T * BP, D + 1)

    vmem = pl.BlockSpec(memory_space=pltpu.MemorySpace.VMEM)
    out = pl.pallas_call(
        recognition_rnn_kernel,
        out_shape=jax.ShapeDtypeStruct((BP, 128), jnp.float32),
        in_specs=[vmem, vmem, vmem, vmem],
        out_specs=vmem,
    )(x_flat, wi_packed, whh_packed, misc)
    # TODO(synk): for large B, add a batch grid axis with dimension_semantics=("parallel",)
    # to shard across v7x TensorCores; unnecessary at B=2.
    return out[:B, :latent_dim]


def recognition_rnn_reference(x, params):
    """Pure-JAX reference of the PyTorch forward (for validation)."""
    H = params["w_hh"].shape[1]
    w_ih, w_hh = params["w_ih"], params["w_hh"]
    b_ih, b_hh = params["b_ih"], params["b_hh"]
    B, T, D = x.shape

    def step(h, xt):
        gi = xt @ w_ih.T + b_ih
        gh = h @ w_hh.T + b_hh
        r = jax.nn.sigmoid(gi[:, :H] + gh[:, :H])
        z = jax.nn.sigmoid(gi[:, H:2 * H] + gh[:, H:2 * H])
        n = jnp.tanh(gi[:, 2 * H:] + r * gh[:, 2 * H:])
        h_new = (1.0 - z) * n + z * h
        return h_new, None

    h0 = jnp.zeros((B, H), dtype=jnp.float32)
    hT, _ = lax.scan(step, h0, jnp.transpose(x, (1, 0, 2)))
    return hT @ params["w_lin"].T + params["b_lin"]


if __name__ == "__main__":
    key = jax.random.PRNGKey(0)
    k_param, k_x = jax.random.split(key)
    params = init_params(k_param)
    x = jax.random.normal(k_x, (BATCH, SEQ, OBS_DIM), dtype=jnp.float32)

    y = recognition_rnn_forward(x, params)
    jax.block_until_ready(y)

    y_ref = recognition_rnn_reference(x, params)
    assert y.shape == (BATCH, LATENT_DIM)
    assert jnp.allclose(y, y_ref, atol=1e-5, rtol=1e-5), (y, y_ref)

    print("KERNEL_OK")
</pallas_src>

<mosaic_0001>
module attributes {stable_mosaic.version = 11 : i64} {
  func.func @recognition_rnn_kernel(%arg0: memref<64x3xf32, #tpu.memory_space<vmem>>, %arg1: memref<3x384xf32, #tpu.memory_space<vmem>>, %arg2: memref<128x384xf32, #tpu.memory_space<vmem>>, %arg3: memref<136x128xf32, #tpu.memory_space<vmem>>, %arg4: memref<8x128xf32, #tpu.memory_space<vmem>>) attributes {dimension_semantics = [], scalar_prefetch = 0 : i64, scratch_operands = 0 : i64, tpu.core_type = #tpu.core_type<tc>} {
    %c0 = arith.constant 0 : index
    %c0_0 = arith.constant 0 : index
    %0 = vector.load %arg0[%c0, %c0_0] : memref<64x3xf32, #tpu.memory_space<vmem>>, vector<64x3xf32>
    %c0_1 = arith.constant 0 : index
    %c0_2 = arith.constant 0 : index
    %1 = vector.load %arg1[%c0_1, %c0_2] : memref<3x384xf32, #tpu.memory_space<vmem>>, vector<3x384xf32>
    %cst = arith.constant dense<0.000000e+00> : vector<64x384xf32>
    %2 = tpu.matmul %0, %1, %cst {dimension_numbers = #tpu.dot_dimension_numbers<[1], [0], [0], [1], [0, 0, 1, 1], [], []>} : vector<64x3xf32>, vector<3x384xf32>, vector<64x384xf32> -> vector<64x384xf32>
    %c0_3 = arith.constant 0 : index
    %c0_4 = arith.constant 0 : index
    %3 = vector.load %arg2[%c0_3, %c0_4] : memref<128x384xf32, #tpu.memory_space<vmem>>, vector<128x384xf32>
    %c128 = arith.constant 128 : index
    %c0_5 = arith.constant 0 : index
    %4 = vector.load %arg3[%c128, %c0_5] : memref<136x128xf32, #tpu.memory_space<vmem>>, vector<1x128xf32>
    %cst_6 = arith.constant 0.000000e+00 : f32
    %5 = vector.broadcast %cst_6 : f32 to vector<8x128xf32>
    %6 = vector.extract_strided_slice %2 {offsets = [0, 0], sizes = [8, 384], strides = [1, 1]} : vector<64x384xf32> to vector<8x384xf32>
    %cst_7 = arith.constant dense<0.000000e+00> : vector<8x384xf32>
    %7 = tpu.matmul %5, %3, %cst_7 {dimension_numbers = #tpu.dot_dimension_numbers<[1], [0], [0], [1], [0, 0, 1, 1], [], []>} : vector<8x128xf32>, vector<128x384xf32>, vector<8x384xf32> -> vector<8x384xf32>
    %8 = vector.extract_strided_slice %6 {offsets = [0, 0], sizes = [8, 128], strides = [1, 1]} : vector<8x384xf32> to vector<8x128xf32>
    %9 = vector.extract_strided_slice %7 {offsets = [0, 0], sizes = [8, 128], strides = [1, 1]} : vector<8x384xf32> to vector<8x128xf32>
    %10 = arith.addf %8, %9 : vector<8x128xf32>
    %11 = arith.negf %10 : vector<8x128xf32>
    %12 = math.exp %11 : vector<8x128xf32>
    %cst_8 = arith.constant 1.000000e+00 : f32
    %13 = vector.broadcast %cst_8 : f32 to vector<8x128xf32>
    %14 = arith.addf %13, %12 : vector<8x128xf32>
    %15 = arith.divf %13, %14 : vector<8x128xf32>
    %16 = vector.extract_strided_slice %6 {offsets = [0, 128], sizes = [8, 128], strides = [1, 1]} : vector<8x384xf32> to vector<8x128xf32>
    %17 = vector.extract_strided_slice %7 {offsets = [0, 128], sizes = [8, 128], strides = [1, 1]} : vector<8x384xf32> to vector<8x128xf32>
    %18 = arith.addf %16, %17 : vector<8x128xf32>
    %19 = arith.negf %18 : vector<8x128xf32>
    %20 = math.exp %19 : vector<8x128xf32>
    %cst_9 = arith.constant 1.000000e+00 : f32
    %21 = vector.broadcast %cst_9 : f32 to vector<8x128xf32>
    %22 = arith.addf %21, %20 : vector<8x128xf32>
    %23 = arith.divf %21, %22 : vector<8x128xf32>
    %24 = vector.extract_strided_slice %6 {offsets = [0, 256], sizes = [8, 128], strides = [1, 1]} : vector<8x384xf32> to vector<8x128xf32>
    %25 = vector.extract_strided_slice %7 {offsets = [0, 256], sizes = [8, 128], strides = [1, 1]} : vector<8x384xf32> to vector<8x128xf32>
    %26 = vector.broadcast %4 : vector<1x128xf32> to vector<8x128xf32>
    %27 = arith.addf %25, %26 : vector<8x128xf32>
    %28 = arith.mulf %15, %27 : vector<8x128xf32>
    %29 = arith.addf %24, %28 : vector<8x128xf32>
    %30 = math.tanh %29 : vector<8x128xf32>
    %cst_10 = arith.constant 1.000000e+00 : f32
    %31 = vector.broadcast %cst_10 : f32 to vector<8x128xf32>
    %32 = arith.subf %31, %23 : vector<8x128xf32>
    %33 = arith.mulf %32, %30 : vector<8x128xf32>
    %34 = arith.mulf %23, %5 : vector<8x128xf32>
    %35 = arith.addf %33, %34 : vector<8x128xf32>
    %36 = vector.extract_strided_slice %2 {offsets = [8, 0], sizes = [8, 384], strides = [1, 1]} : vector<64x384xf32> to vector<8x384xf32>
    %cst_11 = arith.constant dense<0.000000e+00> : vector<8x384xf32>
    %37 = tpu.matmul %35, %3, %cst_11 {dimension_numbers = #tpu.dot_dimension_numbers<[1], [0], [0], [1], [0, 0, 1, 1], [], []>} : vector<8x128xf32>, vector<128x384xf32>, vector<8x384xf32> -> vector<8x384xf32>
    %38 = vector.extract_strided_slice %36 {offsets = [0, 0], sizes = [8, 128], strides = [1, 1]} : vector<8x384xf32> to vector<8x128xf32>
    %39 = vector.extract_strided_slice %37 {offsets = [0, 0], sizes = [8, 128], strides = [1, 1]} : vector<8x384xf32> to vector<8x128xf32>
    %40 = arith.addf %38, %39 : vector<8x128xf32>
    %41 = arith.negf %40 : vector<8x128xf32>
    %42 = math.exp %41 : vector<8x128xf32>
    %cst_12 = arith.constant 1.000000e+00 : f32
    %43 = vector.broadcast %cst_12 : f32 to vector<8x128xf32>
    %44 = arith.addf %43, %42 : vector<8x128xf32>
    %45 = arith.divf %43, %44 : vector<8x128xf32>
    %46 = vector.extract_strided_slice %36 {offsets = [0, 128], sizes = [8, 128], strides = [1, 1]} : vector<8x384xf32> to vector<8x128xf32>
    %47 = vector.extract_strided_slice %37 {offsets = [0, 128], sizes = [8, 128], strides = [1, 1]} : vector<8x384xf32> to vector<8x128xf32>
    %48 = arith.addf %46, %47 : vector<8x128xf32>
    %49 = arith.negf %48 : vector<8x128xf32>
    %50 = math.exp %49 : vector<8x128xf32>
    %cst_13 = arith.constant 1.000000e+00 : f32
    %51 = vector.broadcast %cst_13 : f32 to vector<8x128xf32>
    %52 = arith.addf %51, %50 : vector<8x128xf32>
    %53 = arith.divf %51, %52 : vector<8x128xf32>
    %54 = vector.extract_strided_slice %36 {offsets = [0, 256], sizes = [8, 128], strides = [1, 1]} : vector<8x384xf32> to vector<8x128xf32>
    %55 = vector.extract_strided_slice %37 {offsets = [0, 256], sizes = [8, 128], strides = [1, 1]} : vector<8x384xf32> to vector<8x128xf32>
    %56 = vector.broadcast %4 : vector<1x128xf32> to vector<8x128xf32>
    %57 = arith.addf %55, %56 : vector<8x128xf32>
    %58 = arith.mulf %45, %57 : vector<8x128xf32>
    %59 = arith.addf %54, %58 : vector<8x128xf32>
    %60 = math.tanh %59 : vector<8x128xf32>
    %cst_14 = arith.constant 1.000000e+00 : f32
    %61 = vector.broadcast %cst_14 : f32 to vector<8x128xf32>
    %62 = arith.subf %61, %53 : vector<8x128xf32>
    %63 = arith.mulf %62, %60 : vector<8x128xf32>
    %64 = arith.mulf %53, %35 : vector<8x128xf32>
    %65 = arith.addf %63, %64 : vector<8x128xf32>
    %66 = vector.extract_strided_slice %2 {offsets = [16, 0], sizes = [8, 384], strides = [1, 1]} : vector<64x384xf32> to vector<8x384xf32>
    %cst_15 = arith.constant dense<0.000000e+00> : vector<8x384xf32>
    %67 = tpu.matmul %65, %3, %cst_15 {dimension_numbers = #tpu.dot_dimension_numbers<[1], [0], [0], [1], [0, 0, 1, 1], [], []>} : vector<8x128xf32>, vector<128x384xf32>, vector<8x384xf32> -> vector<8x384xf32>
    %68 = vector.extract_strided_slice %66 {offsets = [0, 0], sizes = [8, 128], strides = [1, 1]} : vector<8x384xf32> to vector<8x128xf32>
    %69 = vector.extract_strided_slice %67 {offsets = [0, 0], sizes = [8, 128], strides = [1, 1]} : vector<8x384xf32> to vector<8x128xf32>
    %70 = arith.addf %68, %69 : vector<8x128xf32>
    %71 = arith.negf %70 : vector<8x128xf32>
    %72 = math.exp %71 : vector<8x128xf32>
    %cst_16 = arith.constant 1.000000e+00 : f32
    %73 = vector.broadcast %cst_16 : f32 to vector<8x128xf32>
    %74 = arith.addf %73, %72 : vector<8x128xf32>
    %75 = arith.divf %73, %74 : vector<8x128xf32>
    %76 = vector.extract_strided_slice %66 {offsets = [0, 128], sizes = [8, 128], strides = [1, 1]} : vector<8x384xf32> to vector<8x128xf32>
    %77 = vector.extract_strided_slice %67 {offsets = [0, 128], sizes = [8, 128], strides = [1, 1]} : vector<8x384xf32> to vector<8x128xf32>
    %78 = arith.addf %76, %77 : vector<8x128xf32>
    %79 = arith.negf %78 : vector<8x128xf32>
    %80 = math.exp %79 : vector<8x128xf32>
    %cst_17 = arith.constant 1.000000e+00 : f32
    %81 = vector.broadcast %cst_17 : f32 to vector<8x128xf32>
    %82 = arith.addf %81, %80 : vector<8x128xf32>
    %83 = arith.divf %81, %82 : vector<8x128xf32>
    %84 = vector.extract_strided_slice %66 {offsets = [0, 256], sizes = [8, 128], strides = [1, 1]} : vector<8x384xf32> to vector<8x128xf32>
    %85 = vector.extract_strided_slice %67 {offsets = [0, 256], sizes = [8, 128], strides = [1, 1]} : vector<8x384xf32> to vector<8x128xf32>
    %86 = vector.broadcast %4 : vector<1x128xf32> to vector<8x128xf32>
    %87 = arith.addf %85, %86 : vector<8x128xf32>
    %88 = arith.mulf %75, %87 : vector<8x128xf32>
    %89 = arith.addf %84, %88 : vector<8x128xf32>
    %90 = math.tanh %89 : vector<8x128xf32>
    %cst_18 = arith.constant 1.000000e+00 : f32
    %91 = vector.broadcast %cst_18 : f32 to vector<8x128xf32>
    %92 = arith.subf %91, %83 : vector<8x128xf32>
    %93 = arith.mulf %92, %90 : vector<8x128xf32>
    %94 = arith.mulf %83, %65 : vector<8x128xf32>
    %95 = arith.addf %93, %94 : vector<8x128xf32>
    %96 = vector.extract_strided_slice %2 {offsets = [24, 0], sizes = [8, 384], strides = [1, 1]} : vector<64x384xf32> to vector<8x384xf32>
    %cst_19 = arith.constant dense<0.000000e+00> : vector<8x384xf32>
    %97 = tpu.matmul %95, %3, %cst_19 {dimension_numbers = #tpu.dot_dimension_numbers<[1], [0], [0], [1], [0, 0, 1, 1], [], []>} : vector<8x128xf32>, vector<128x384xf32>, vector<8x384xf32> -> vector<8x384xf32>
    %98 = vector.extract_strided_slice %96 {offsets = [0, 0], sizes = [8, 128], strides = [1, 1]} : vector<8x384xf32> to vector<8x128xf32>
    %99 = vector.extract_strided_slice %97 {offsets = [0, 0], sizes = [8, 128], strides = [1, 1]} : vector<8x384xf32> to vector<8x128xf32>
    %100 = arith.addf %98, %99 : vector<8x128xf32>
    %101 = arith.negf %100 : vector<8x128xf32>
    %102 = math.exp %101 : vector<8x128xf32>
    %cst_20 = arith.constant 1.000000e+00 : f32
    %103 = vector.broadcast %cst_20 : f32 to vector<8x128xf32>
    %104 = arith.addf %103, %102 : vector<8x128xf32>
    %105 = arith.divf %103, %104 : vector<8x128xf32>
    %106 = vector.extract_strided_slice %96 {offsets = [0, 128], sizes = [8, 128], strides = [1, 1]} : vector<8x384xf32> to vector<8x128xf32>
    %107 = vector.extract_strided_slice %97 {offsets = [0, 128], sizes = [8, 128], strides = [1, 1]} : vector<8x384xf32> to vector<8x128xf32>
    %108 = arith.addf %106, %107 : vector<8x128xf32>
    %109 = arith.negf %108 : vector<8x128xf32>
    %110 = math.exp %109 : vector<8x128xf32>
    %cst_21 = arith.constant 1.000000e+00 : f32
    %111 = vector.broadcast %cst_21 : f32 to vector<8x128xf32>
    %112 = arith.addf %111, %110 : vector<8x128xf32>
    %113 = arith.divf %111, %112 : vector<8x128xf32>
    %114 = vector.extract_strided_slice %96 {offsets = [0, 256], sizes = [8, 128], strides = [1, 1]} : vector<8x384xf32> to vector<8x128xf32>
    %115 = vector.extract_strided_slice %97 {offsets = [0, 256], sizes = [8, 128], strides = [1, 1]} : vector<8x384xf32> to vector<8x128xf32>
    %116 = vector.broadcast %4 : vector<1x128xf32> to vector<8x128xf32>
    %117 = arith.addf %115, %116 : vector<8x128xf32>
    %118 = arith.mulf %105, %117 : vector<8x128xf32>
    %119 = arith.addf %114, %118 : vector<8x128xf32>
    %120 = math.tanh %119 : vector<8x128xf32>
    %cst_22 = arith.constant 1.000000e+00 : f32
    %121 = vector.broadcast %cst_22 : f32 to vector<8x128xf32>
    %122 = arith.subf %121, %113 : vector<8x128xf32>
    %123 = arith.mulf %122, %120 : vector<8x128xf32>
    %124 = arith.mulf %113, %95 : vector<8x128xf32>
    %125 = arith.addf %123, %124 : vector<8x128xf32>
    %126 = vector.extract_strided_slice %2 {offsets = [32, 0], sizes = [8, 384], strides = [1, 1]} : vector<64x384xf32> to vector<8x384xf32>
    %cst_23 = arith.constant dense<0.000000e+00> : vector<8x384xf32>
    %127 = tpu.matmul %125, %3, %cst_23 {dimension_numbers = #tpu.dot_dimension_numbers<[1], [0], [0], [1], [0, 0, 1, 1], [], []>} : vector<8x128xf32>, vector<128x384xf32>, vector<8x384xf32> -> vector<8x384xf32>
    %128 = vector.extract_strided_slice %126 {offsets = [0, 0], sizes = [8, 128], strides = [1, 1]} : vector<8x384xf32> to vector<8x128xf32>
    %129 = vector.extract_strided_slice %127 {offsets = [0, 0], sizes = [8, 128], strides = [1, 1]} : vector<8x384xf32> to vector<8x128xf32>
    %130 = arith.addf %128, %129 : vector<8x128xf32>
    %131 = arith.negf %130 : vector<8x128xf32>
    %132 = math.exp %131 : vector<8x128xf32>
    %cst_24 = arith.constant 1.000000e+00 : f32
    %133 = vector.broadcast %cst_24 : f32 to vector<8x128xf32>
    %134 = arith.addf %133, %132 : vector<8x128xf32>
    %135 = arith.divf %133, %134 : vector<8x128xf32>
    %136 = vector.extract_strided_slice %126 {offsets = [0, 128], sizes = [8, 128], strides = [1, 1]} : vector<8x384xf32> to vector<8x128xf32>
    %137 = vector.extract_strided_slice %127 {offsets = [0, 128], sizes = [8, 128], strides = [1, 1]} : vector<8x384xf32> to vector<8x128xf32>
    %138 = arith.addf %136, %137 : vector<8x128xf32>
    %139 = arith.negf %138 : vector<8x128xf32>
    %140 = math.exp %139 : vector<8x128xf32>
    %cst_25 = arith.constant 1.000000e+00 : f32
    %141 = vector.broadcast %cst_25 : f32 to vector<8x128xf32>
    %142 = arith.addf %141, %140 : vector<8x128xf32>
    %143 = arith.divf %141, %142 : vector<8x128xf32>
    %144 = vector.extract_strided_slice %126 {offsets = [0, 256], sizes = [8, 128], strides = [1, 1]} : vector<8x384xf32> to vector<8x128xf32>
    %145 = vector.extract_strided_slice %127 {offsets = [0, 256], sizes = [8, 128], strides = [1, 1]} : vector<8x384xf32> to vector<8x128xf32>
    %146 = vector.broadcast %4 : vector<1x128xf32> to vector<8x128xf32>
    %147 = arith.addf %145, %146 : vector<8x128xf32>
    %148 = arith.mulf %135, %147 : vector<8x128xf32>
    %149 = arith.addf %144, %148 : vector<8x128xf32>
    %150 = math.tanh %149 : vector<8x128xf32>
    %cst_26 = arith.constant 1.000000e+00 : f32
    %151 = vector.broadcast %cst_26 : f32 to vector<8x128xf32>
    %152 = arith.subf %151, %143 : vector<8x128xf32>
    %153 = arith.mulf %152, %150 : vector<8x128xf32>
    %154 = arith.mulf %143, %125 : vector<8x128xf32>
    %155 = arith.addf %153, %154 : vector<8x128xf32>
    %156 = vector.extract_strided_slice %2 {offsets = [40, 0], sizes = [8, 384], strides = [1, 1]} : vector<64x384xf32> to vector<8x384xf32>
    %cst_27 = arith.constant dense<0.000000e+00> : vector<8x384xf32>
    %157 = tpu.matmul %155, %3, %cst_27 {dimension_numbers = #tpu.dot_dimension_numbers<[1], [0], [0], [1], [0, 0, 1, 1], [], []>} : vector<8x128xf32>, vector<128x384xf32>, vector<8x384xf32> -> vector<8x384xf32>
    %158 = vector.extract_strided_slice %156 {offsets = [0, 0], sizes = [8, 128], strides = [1, 1]} : vector<8x384xf32> to vector<8x128xf32>
    %159 = vector.extract_strided_slice %157 {offsets = [0, 0], sizes = [8, 128], strides = [1, 1]} : vector<8x384xf32> to vector<8x128xf32>
    %160 = arith.addf %158, %159 : vector<8x128xf32>
    %161 = arith.negf %160 : vector<8x128xf32>
    %162 = math.exp %161 : vector<8x128xf32>
    %cst_28 = arith.constant 1.000000e+00 : f32
    %163 = vector.broadcast %cst_28 : f32 to vector<8x128xf32>
    %164 = arith.addf %163, %162 : vector<8x128xf32>
    %165 = arith.divf %163, %164 : vector<8x128xf32>
    %166 = vector.extract_strided_slice %156 {offsets = [0, 128], sizes = [8, 128], strides = [1, 1]} : vector<8x384xf32> to vector<8x128xf32>
    %167 = vector.extract_strided_slice %157 {offsets = [0, 128], sizes = [8, 128], strides = [1, 1]} : vector<8x384xf32> to vector<8x128xf32>
    %168 = arith.addf %166, %167 : vector<8x128xf32>
    %169 = arith.negf %168 : vector<8x128xf32>
    %170 = math.exp %169 : vector<8x128xf32>
    %cst_29 = arith.constant 1.000000e+00 : f32
    %171 = vector.broadcast %cst_29 : f32 to vector<8x128xf32>
    %172 = arith.addf %171, %170 : vector<8x128xf32>
    %173 = arith.divf %171, %172 : vector<8x128xf32>
    %174 = vector.extract_strided_slice %156 {offsets = [0, 256], sizes = [8, 128], strides = [1, 1]} : vector<8x384xf32> to vector<8x128xf32>
    %175 = vector.extract_strided_slice %157 {offsets = [0, 256], sizes = [8, 128], strides = [1, 1]} : vector<8x384xf32> to vector<8x128xf32>
    %176 = vector.broadcast %4 : vector<1x128xf32> to vector<8x128xf32>
    %177 = arith.addf %175, %176 : vector<8x128xf32>
    %178 = arith.mulf %165, %177 : vector<8x128xf32>
    %179 = arith.addf %174, %178 : vector<8x128xf32>
    %180 = math.tanh %179 : vector<8x128xf32>
    %cst_30 = arith.constant 1.000000e+00 : f32
    %181 = vector.broadcast %cst_30 : f32 to vector<8x128xf32>
    %182 = arith.subf %181, %173 : vector<8x128xf32>
    %183 = arith.mulf %182, %180 : vector<8x128xf32>
    %184 = arith.mulf %173, %155 : vector<8x128xf32>
    %185 = arith.addf %183, %184 : vector<8x128xf32>
    %186 = vector.extract_strided_slice %2 {offsets = [48, 0], sizes = [8, 384], strides = [1, 1]} : vector<64x384xf32> to vector<8x384xf32>
    %cst_31 = arith.constant dense<0.000000e+00> : vector<8x384xf32>
    %187 = tpu.matmul %185, %3, %cst_31 {dimension_numbers = #tpu.dot_dimension_numbers<[1], [0], [0], [1], [0, 0, 1, 1], [], []>} : vector<8x128xf32>, vector<128x384xf32>, vector<8x384xf32> -> vector<8x384xf32>
    %188 = vector.extract_strided_slice %186 {offsets = [0, 0], sizes = [8, 128], strides = [1, 1]} : vector<8x384xf32> to vector<8x128xf32>
    %189 = vector.extract_strided_slice %187 {offsets = [0, 0], sizes = [8, 128], strides = [1, 1]} : vector<8x384xf32> to vector<8x128xf32>
    %190 = arith.addf %188, %189 : vector<8x128xf32>
    %191 = arith.negf %190 : vector<8x128xf32>
    %192 = math.exp %191 : vector<8x128xf32>
    %cst_32 = arith.constant 1.000000e+00 : f32
    %193 = vector.broadcast %cst_32 : f32 to vector<8x128xf32>
    %194 = arith.addf %193, %192 : vector<8x128xf32>
    %195 = arith.divf %193, %194 : vector<8x128xf32>
    %196 = vector.extract_strided_slice %186 {offsets = [0, 128], sizes = [8, 128], strides = [1, 1]} : vector<8x384xf32> to vector<8x128xf32>
    %197 = vector.extract_strided_slice %187 {offsets = [0, 128], sizes = [8, 128], strides = [1, 1]} : vector<8x384xf32> to vector<8x128xf32>
    %198 = arith.addf %196, %197 : vector<8x128xf32>
    %199 = arith.negf %198 : vector<8x128xf32>
    %200 = math.exp %199 : vector<8x128xf32>
    %cst_33 = arith.constant 1.000000e+00 : f32
    %201 = vector.broadcast %cst_33 : f32 to vector<8x128xf32>
    %202 = arith.addf %201, %200 : vector<8x128xf32>
    %203 = arith.divf %201, %202 : vector<8x128xf32>
    %204 = vector.extract_strided_slice %186 {offsets = [0, 256], sizes = [8, 128], strides = [1, 1]} : vector<8x384xf32> to vector<8x128xf32>
    %205 = vector.extract_strided_slice %187 {offsets = [0, 256], sizes = [8, 128], strides = [1, 1]} : vector<8x384xf32> to vector<8x128xf32>
    %206 = vector.broadcast %4 : vector<1x128xf32> to vector<8x128xf32>
    %207 = arith.addf %205, %206 : vector<8x128xf32>
    %208 = arith.mulf %195, %207 : vector<8x128xf32>
    %209 = arith.addf %204, %208 : vector<8x128xf32>
    %210 = math.tanh %209 : vector<8x128xf32>
    %cst_34 = arith.constant 1.000000e+00 : f32
    %211 = vector.broadcast %cst_34 : f32 to vector<8x128xf32>
    %212 = arith.subf %211, %203 : vector<8x128xf32>
    %213 = arith.mulf %212, %210 : vector<8x128xf32>
    %214 = arith.mulf %203, %185 : vector<8x128xf32>
    %215 = arith.addf %213, %214 : vector<8x128xf32>
    %216 = vector.extract_strided_slice %2 {offsets = [56, 0], sizes = [8, 384], strides = [1, 1]} : vector<64x384xf32> to vector<8x384xf32>
    %cst_35 = arith.constant dense<0.000000e+00> : vector<8x384xf32>
    %217 = tpu.matmul %215, %3, %cst_35 {dimension_numbers = #tpu.dot_dimension_numbers<[1], [0], [0], [1], [0, 0, 1, 1], [], []>} : vector<8x128xf32>, vector<128x384xf32>, vector<8x384xf32> -> vector<8x384xf32>
    %218 = vector.extract_strided_slice %216 {offsets = [0, 0], sizes = [8, 128], strides = [1, 1]} : vector<8x384xf32> to vector<8x128xf32>
    %219 = vector.extract_strided_slice %217 {offsets = [0, 0], sizes = [8, 128], strides = [1, 1]} : vector<8x384xf32> to vector<8x128xf32>
    %220 = arith.addf %218, %219 : vector<8x128xf32>
    %221 = arith.negf %220 : vector<8x128xf32>
    %222 = math.exp %221 : vector<8x128xf32>
    %cst_36 = arith.constant 1.000000e+00 : f32
    %223 = vector.broadcast %cst_36 : f32 to vector<8x128xf32>
    %224 = arith.addf %223, %222 : vector<8x128xf32>
    %225 = arith.divf %223, %224 : vector<8x128xf32>
    %226 = vector.extract_strided_slice %216 {offsets = [0, 128], sizes = [8, 128], strides = [1, 1]} : vector<8x384xf32> to vector<8x128xf32>
    %227 = vector.extract_strided_slice %217 {offsets = [0, 128], sizes = [8, 128], strides = [1, 1]} : vector<8x384xf32> to vector<8x128xf32>
    %228 = arith.addf %226, %227 : vector<8x128xf32>
    %229 = arith.negf %228 : vector<8x128xf32>
    %230 = math.exp %229 : vector<8x128xf32>
    %cst_37 = arith.constant 1.000000e+00 : f32
    %231 = vector.broadcast %cst_37 : f32 to vector<8x128xf32>
    %232 = arith.addf %231, %230 : vector<8x128xf32>
    %233 = arith.divf %231, %232 : vector<8x128xf32>
    %234 = vector.extract_strided_slice %216 {offsets = [0, 256], sizes = [8, 128], strides = [1, 1]} : vector<8x384xf32> to vector<8x128xf32>
    %235 = vector.extract_strided_slice %217 {offsets = [0, 256], sizes = [8, 128], strides = [1, 1]} : vector<8x384xf32> to vector<8x128xf32>
    %236 = vector.broadcast %4 : vector<1x128xf32> to vector<8x128xf32>
    %237 = arith.addf %235, %236 : vector<8x128xf32>
    %238 = arith.mulf %225, %237 : vector<8x128xf32>
    %239 = arith.addf %234, %238 : vector<8x128xf32>
    %240 = math.tanh %239 : vector<8x128xf32>
    %cst_38 = arith.constant 1.000000e+00 : f32
    %241 = vector.broadcast %cst_38 : f32 to vector<8x128xf32>
    %242 = arith.subf %241, %233 : vector<8x128xf32>
    %243 = arith.mulf %242, %240 : vector<8x128xf32>
    %244 = arith.mulf %233, %215 : vector<8x128xf32>
    %245 = arith.addf %243, %244 : vector<8x128xf32>
    %c0_39 = arith.constant 0 : index
    %c0_40 = arith.constant 0 : index
    %246 = vector.load %arg3[%c0_39, %c0_40] : memref<136x128xf32, #tpu.memory_space<vmem>>, vector<128x128xf32>
    %c129 = arith.constant 129 : index
    %c0_41 = arith.constant 0 : index
    %247 = vector.load %arg3[%c129, %c0_41] : memref<136x128xf32, #tpu.memory_space<vmem>>, vector<1x128xf32>
    %cst_42 = arith.constant dense<0.000000e+00> : vector<8x128xf32>
    %248 = tpu.matmul %245, %246, %cst_42 {dimension_numbers = #tpu.dot_dimension_numbers<[1], [0], [0], [1], [0, 0, 1, 1], [], []>} : vector<8x128xf32>, vector<128x128xf32>, vector<8x128xf32> -> vector<8x128xf32>
    %249 = vector.broadcast %247 : vector<1x128xf32> to vector<8x128xf32>
    %250 = arith.addf %248, %249 : vector<8x128xf32>
    %c0_43 = arith.constant 0 : index
    %c0_44 = arith.constant 0 : index
    %251 = vector.load %arg4[%c0_43, %c0_44] : memref<8x128xf32, #tpu.memory_space<vmem>>, vector<8x128xf32>
    tpu.vector_store %arg4[%c0_43, %c0_44], %250 {strides = array<i32>} : memref<8x128xf32, #tpu.memory_space<vmem>>, vector<8x128xf32>,
    return
  }
}

</mosaic_0001>

<llo_original>
// kernel: recognition_rnn_forward.1
$region0: #{recognition_rnn_forward.1}
  #allocation0 [shape = 'u32[]', space=smem, size = 0x4, offset = 0x4, fixed_abs, tag = 'smem constant byte address 0x4 - core index']
  #allocation1 [shape = 'u32[144,128]{1,0:T(1,128)}', space=vmem, size = 0x12000, scoped, tag = 'internal scratch']
  %s0 = inlined_call_operand.vmem [shape: f32[64,3], index: 0, kind: input, shape index: {}]
  %s1 = inlined_call_operand.vmem [shape: f32[3,384], index: 1, kind: input, shape index: {}]
  %s2 = inlined_call_operand.vmem [shape: f32[128,384], index: 2, kind: input, shape index: {}]
  %s3 = inlined_call_operand.vmem [shape: f32[136,128], index: 3, kind: input, shape index: {}]
  %s4 = inlined_call_operand.vmem [shape: f32[8,128], index: 4, kind: output, shape index: {}]
  %s5 = sld [smem:[#allocation0]]
  $region26: #{recognition_rnn_forward.1} parent=0
    _
  %s7 = ssub.s32 1, %s5
  %s8 = scalar_select 0, %s7, %s5
  // Predicated region
  $region2: #{recognition_rnn_forward.1} parent=0 // pred_check
    _
  $region3: #{recognition_rnn_forward.1} parent=0 // pred_check_branch
    %10 = sbr.rel (0) target = $region5
  $region4: #{recognition_rnn_forward.1} parent=0 // pred_region
    _
  $region5: #{recognition_rnn_forward.1} parent=0 // pred_fallthru
    _
  // Predicated region
  $region6: #{recognition_rnn_forward.1} parent=0 // pred_check
    _
  $region7: #{recognition_rnn_forward.1} parent=0 // pred_check_branch
    %12 = sbr.rel (0) target = $region9
  $region8: #{recognition_rnn_forward.1} parent=0 // pred_region
    _
  $region9: #{recognition_rnn_forward.1} parent=0 // pred_fallthru
    _
  // Predicated region
  $region10: #{recognition_rnn_forward.1} parent=0 // pred_check
    _
  $region11: #{recognition_rnn_forward.1} parent=0 // pred_check_branch
    %14 = sbr.rel (0) target = $region13
  $region12: #{recognition_rnn_forward.1} parent=0 // pred_region
    _
  $region13: #{recognition_rnn_forward.1} parent=0 // pred_fallthru
    _
  // Predicated region
  $region14: #{recognition_rnn_forward.1} parent=0 // pred_check
    _
  $region15: #{recognition_rnn_forward.1} parent=0 // pred_check_branch
    %16 = sbr.rel (0) target = $region17
  $region16: #{recognition_rnn_forward.1} parent=0 // pred_region
    _
  $region17: #{recognition_rnn_forward.1} parent=0 // pred_fallthru
    _
  %v17 = vld [vmem:[%s0] sm:$0xff]
  %v18 = vld [vmem:[%s0 + $0x8] sm:$0xff]
  %v19 = vld [vmem:[%s0 + $0x10] sm:$0xff]
  %v20 = vld [vmem:[%s0 + $0x18] sm:$0xff]
  %v21 = vld [vmem:[%s0 + $0x20] sm:$0xff]
  %v22 = vld [vmem:[%s0 + $0x28] sm:$0xff]
  %v23 = vld [vmem:[%s0 + $0x30] sm:$0xff]
  %v24 = vld [vmem:[%s0 + $0x38] sm:$0xff]
  %v25 = vld [vmem:[%s1] sm:$0x77]
  %v26 = vld [vmem:[%s1 + $0x8] sm:$0x7]
  %v29 = vcombine.high %v25, %v25
  %vm30 = vcmask 23552
  %v32 = vsel %vm30, %v17, 0
  %v35 = vsel %vm30, %v18, 0
  %v38 = vsel %vm30, %v19, 0
  %v41 = vsel %vm30, %v20, 0
  %v44 = vsel %vm30, %v21, 0
  %v47 = vsel %vm30, %v22, 0
  %v50 = vsel %vm30, %v23, 0
  %v53 = vsel %vm30, %v24, 0
  %vm55 = vcmask 1042432
  %v56 = vsel %vm55, %v25, 0
  %v58 = vsel %vm55, %v29, 0
  %v60 = vsel %vm55, %v26, 0
  %62 = vmatprep.subr.mxu0 %v58
  %63 = vmatpush1.msra.mxu0 %v56
  %64 = vmatprep.subr.mxu0 0.0
  %65 = vmatpush1.msra.mxu0 0.0
  %66 = vmatprep.subr.mxu0 0.0
  %67 = vmatpush1.msra.mxu0 0.0
  %68 = vmatprep.subr.mxu0 0.0
  %69 = vmatpush1.msra.mxu0 0.0
  %70 = vmatprep.subr.mxu0 0.0
  %71 = vmatpush1.msra.mxu0 0.0
  %72 = vmatprep.subr.mxu0 0.0
  %73 = vmatpush1.msra.mxu0 0.0
  %74 = vmatprep.subr.mxu0 0.0
  %75 = vmatpush1.msra.mxu0 0.0
  %76 = vmatprep.subr.mxu0 0.0
  %77 = vmatpush1.msra.mxu0 0.0
  %78 = vmatprep.subr.mxu0 0.0
  %79 = vmatpush1.msra.mxu0 0.0
  %80 = vmatprep.subr.mxu0 0.0
  %81 = vmatpush1.msra.mxu0 0.0
  %82 = vmatprep.subr.mxu0 0.0
  %83 = vmatpush1.msra.mxu0 0.0
  %84 = vmatprep.subr.mxu0 0.0
  %85 = vmatpush1.msra.mxu0 0.0
  %86 = vmatprep.subr.mxu0 0.0
  %87 = vmatpush1.msra.mxu0 0.0
  %88 = vmatprep.subr.mxu0 0.0
  %89 = vmatpush1.msra.mxu0 0.0
  %90 = vmatprep.subr.mxu0 0.0
  %91 = vmatpush1.msra.mxu0 0.0
  %92 = vmatprep.subr.mxu0 0.0
  %93 = vmatpush1.msra.mxu0 0.0
  %94 = vmatprep.subr.mxu0 0.0
  %95 = vmatpush1.msra.mxu0 0.0
  %96 = vmatprep.subr.mxu0 0.0
  %97 = vmatpush1.msra.mxu0 0.0
  %98 = vmatprep.subr.mxu0 0.0
  %99 = vmatpush1.msra.mxu0 0.0
  %100 = vmatprep.subr.mxu0 0.0
  %101 = vmatpush1.msra.mxu0 0.0
  %102 = vmatprep.subr.mxu0 0.0
  %103 = vmatpush1.msra.mxu0 0.0
  %104 = vmatprep.subr.mxu0 0.0
  %105 = vmatpush1.msra.mxu0 0.0
  %106 = vmatprep.subr.mxu0 0.0
  %107 = vmatpush1.msra.mxu0 0.0
  %108 = vmatprep.subr.mxu0 0.0
  %109 = vmatpush1.msra.mxu0 0.0
  %110 = vmatprep.subr.mxu0 0.0
  %111 = vmatpush1.msra.mxu0 0.0
  %112 = vmatprep.subr.mxu0 0.0
  %113 = vmatpush1.msra.mxu0 0.0
  %114 = vmatprep.subr.mxu0 0.0
  %115 = vmatpush1.msra.mxu0 0.0
  %116 = vmatprep.subr.mxu0 0.0
  %117 = vmatpush1.msra.mxu0 0.0
  %118 = vmatprep.subr.mxu0 0.0
  %119 = vmatpush1.msra.mxu0 0.0
  %120 = vmatprep.subr.mxu0 0.0
  %121 = vmatpush1.msra.mxu0 0.0
  %122 = vmatprep.subr.mxu0 0.0
  %123 = vmatpush1.msra.mxu0 0.0
  %124 = vmatprep.subr.mxu0 0.0
  %125 = vmatpush1.msra.mxu0 0.0
  %126 = vmatprep.mubr.f32.mxu0 0.0
  %127 = vmatmul.mubr.f32.gmra.mrb[0].mxu0 %v32
  %v128 = vpop.f32.mrb[0].mxu0
  %v129 = vadd.f32 0.0, %v128
  %v130 = vpop.f32.mrb[0].mxu0
  %v131 = vadd.f32 0.0, %v130
  %132 = vmatprep.mubr.f32.mxu0 0.0
  %133 = vmatmul.mubr.f32.gmra.mrb[0].mxu0 %v35
  %v134 = vpop.f32.mrb[0].mxu0
  %v135 = vadd.f32 0.0, %v134
  %v136 = vpop.f32.mrb[0].mxu0
  %v137 = vadd.f32 0.0, %v136
  %138 = vmatprep.mubr.f32.mxu0 0.0
  %139 = vmatmul.mubr.f32.gmra.mrb[0].mxu0 %v38
  %v140 = vpop.f32.mrb[0].mxu0
  %v141 = vadd.f32 0.0, %v140
  %v142 = vpop.f32.mrb[0].mxu0
  %v143 = vadd.f32 0.0, %v142
  %144 = vmatprep.mubr.f32.mxu0 0.0
  %145 = vmatmul.mubr.f32.gmra.mrb[0].mxu0 %v41
  %v146 = vpop.f32.mrb[0].mxu0
  %v147 = vadd.f32 0.0, %v146
  %v148 = vpop.f32.mrb[0].mxu0
  %v149 = vadd.f32 0.0, %v148
  %150 = vmatprep.mubr.f32.mxu0 0.0
  %151 = vmatmul.mubr.f32.gmra.mrb[0].mxu0 %v44
  %v152 = vpop.f32.mrb[0].mxu0
  %v153 = vadd.f32 0.0, %v152
  %v154 = vpop.f32.mrb[0].mxu0
  %v155 = vadd.f32 0.0, %v154
  %156 = vmatprep.mubr.f32.mxu0 0.0
  %157 = vmatmul.mubr.f32.gmra.mrb[0].mxu0 %v47
  %v158 = vpop.f32.mrb[0].mxu0
  %v159 = vadd.f32 0.0, %v158
  %v160 = vpop.f32.mrb[0].mxu0
  %v161 = vadd.f32 0.0, %v160
  %162 = vmatprep.mubr.f32.mxu0 0.0
  %163 = vmatmul.mubr.f32.gmra.mrb[0].mxu0 %v50
  %v164 = vpop.f32.mrb[0].mxu0
  %v165 = vadd.f32 0.0, %v164
  %v166 = vpop.f32.mrb[0].mxu0
  %v167 = vadd.f32 0.0, %v166
  %168 = vmatprep.mubr.f32.mxu0 0.0
  %169 = vmatmul.mubr.f32.gmra.mrb[0].mxu0 %v53
  %v170 = vpop.f32.mrb[0].mxu0
  %v171 = vadd.f32 0.0, %v170
  %v172 = vpop.f32.mrb[0].mxu0
  %v173 = vadd.f32 0.0, %v172
  %174 = vdwg.mxu0
  %175 = vmatprep.subr.mxu0 0.0
  %176 = vmatpush1.msra.mxu0 %v60
  %177 = vmatprep.subr.mxu0 0.0
  %178 = vmatpush1.msra.mxu0 0.0
  %179 = vmatprep.subr.mxu0 0.0
  %180 = vmatpush1.msra.mxu0 0.0
  %181 = vmatprep.subr.mxu0 0.0
  %182 = vmatpush1.msra.mxu0 0.0
  %183 = vmatprep.subr.mxu0 0.0
  %184 = vmatpush1.msra.mxu0 0.0
  %185 = vmatprep.subr.mxu0 0.0
  %186 = vmatpush1.msra.mxu0 0.0
  %187 = vmatprep.subr.mxu0 0.0
  %188 = vmatpush1.msra.mxu0 0.0
  %189 = vmatprep.subr.mxu0 0.0
  %190 = vmatpush1.msra.mxu0 0.0
  %191 = vmatprep.subr.mxu0 0.0
  %192 = vmatpush1.msra.mxu0 0.0
  %193 = vmatprep.subr.mxu0 0.0
  %194 = vmatpush1.msra.mxu0 0.0
  %195 = vmatprep.subr.mxu0 0.0
  %196 = vmatpush1.msra.mxu0 0.0
  %197 = vmatprep.subr.mxu0 0.0
  %198 = vmatpush1.msra.mxu0 0.0
  %199 = vmatprep.subr.mxu0 0.0
  %200 = vmatpush1.msra.mxu0 0.0
  %201 = vmatprep.subr.mxu0 0.0
  %202 = vmatpush1.msra.mxu0 0.0
  %203 = vmatprep.subr.mxu0 0.0
  %204 = vmatpush1.msra.mxu0 0.0
  %205 = vmatprep.subr.mxu0 0.0
  %206 = vmatpush1.msra.mxu0 0.0
  %207 = vmatprep.subr.mxu0 0.0
  %208 = vmatpush1.msra.mxu0 0.0
  %209 = vmatprep.subr.mxu0 0.0
  %210 = vmatpush1.msra.mxu0 0.0
  %211 = vmatprep.subr.mxu0 0.0
  %212 = vmatpush1.msra.mxu0 0.0
  %213 = vmatprep.subr.mxu0 0.0
  %214 = vmatpush1.msra.mxu0 0.0
  %215 = vmatprep.subr.mxu0 0.0
  %216 = vmatpush1.msra.mxu0 0.0
  %217 = vmatprep.subr.mxu0 0.0
  %218 = vmatpush1.msra.mxu0 0.0
  %219 = vmatprep.subr.mxu0 0.0
  %220 = vmatpush1.msra.mxu0 0.0
  %221 = vmatprep.subr.mxu0 0.0
  %222 = vmatpush1.msra.mxu0 0.0
  %223 = vmatprep.subr.mxu0 0.0
  %224 = vmatpush1.msra.mxu0 0.0
  %225 = vmatprep.subr.mxu0 0.0
  %226 = vmatpush1.msra.mxu0 0.0
  %227 = vmatprep.subr.mxu0 0.0
  %228 = vmatpush1.msra.mxu0 0.0
  %229 = vmatprep.subr.mxu0 0.0
  %230 = vmatpush1.msra.mxu0 0.0
  %231 = vmatprep.subr.mxu0 0.0
  %232 = vmatpush1.msra.mxu0 0.0
  %233 = vmatprep.subr.mxu0 0.0
  %234 = vmatpush1.msra.mxu0 0.0
  %235 = vmatprep.subr.mxu0 0.0
  %236 = vmatpush1.msra.mxu0 0.0
  %237 = vmatprep.subr.mxu0 0.0
  %238 = vmatpush1.msra.mxu0 0.0
  %239 = vmatprep.mubr.f32.mxu0 0.0
  %240 = vmatmul.mubr.f32.gmra.mrb[0].mxu0 %v32
  %v241 = vpop.f32.mrb[0].mxu0
  %v242 = vadd.f32 0.0, %v241
  %v243 = vpop.f32.mrb[0].mxu0
  %244 = vmatprep.mubr.f32.mxu0 0.0
  %245 = vmatmul.mubr.f32.gmra.mrb[0].mxu0 %v35
  %v246 = vpop.f32.mrb[0].mxu0
  %v247 = vadd.f32 0.0, %v246
  %v248 = vpop.f32.mrb[0].mxu0
  %249 = vmatprep.mubr.f32.mxu0 0.0
  %250 = vmatmul.mubr.f32.gmra.mrb[0].mxu0 %v38
  %v251 = vpop.f32.mrb[0].mxu0
  %v252 = vadd.f32 0.0, %v251
  %v253 = vpop.f32.mrb[0].mxu0
  %254 = vmatprep.mubr.f32.mxu0 0.0
  %255 = vmatmul.mubr.f32.gmra.mrb[0].mxu0 %v41
  %v256 = vpop.f32.mrb[0].mxu0
  %v257 = vadd.f32 0.0, %v256
  %v258 = vpop.f32.mrb[0].mxu0
  %259 = vmatprep.mubr.f32.mxu0 0.0
  %260 = vmatmul.mubr.f32.gmra.mrb[0].mxu0 %v44
  %v261 = vpop.f32.mrb[0].mxu0
  %v262 = vadd.f32 0.0, %v261
  %v263 = vpop.f32.mrb[0].mxu0
  %264 = vmatprep.mubr.f32.mxu0 0.0
  %265 = vmatmul.mubr.f32.gmra.mrb[0].mxu0 %v47
  %v266 = vpop.f32.mrb[0].mxu0
  %v267 = vadd.f32 0.0, %v266
  %v268 = vpop.f32.mrb[0].mxu0
  %269 = vmatprep.mubr.f32.mxu0 0.0
  %270 = vmatmul.mubr.f32.gmra.mrb[0].mxu0 %v50
  %v271 = vpop.f32.mrb[0].mxu0
  %v272 = vadd.f32 0.0, %v271
  %v273 = vpop.f32.mrb[0].mxu0
  %274 = vmatprep.mubr.f32.mxu0 0.0
  %275 = vmatmul.mubr.f32.gmra.mrb[0].mxu0 %v53
  %v276 = vpop.f32.mrb[0].mxu0
  %v277 = vadd.f32 0.0, %v276
  %v278 = vpop.f32.mrb[0].mxu0
  %279 = vdwg.mxu0
  %v280 = vld [vmem:[%s2] sm:$0xff]
  %v281 = vld [vmem:[%s2 + $0x8] sm:$0xff]
  %v282 = vld [vmem:[%s2 + $0x10] sm:$0xff]
  %v283 = vld [vmem:[%s2 + $0x18] sm:$0xff]
  %v284 = vld [vmem:[%s2 + $0x20] sm:$0xff]
  %v285 = vld [vmem:[%s2 + $0x28] sm:$0xff]
  %v286 = vld [vmem:[%s2 + $0x30] sm:$0xff]
  %v287 = vld [vmem:[%s2 + $0x38] sm:$0xff]
  %v288 = vld [vmem:[%s2 + $0x40] sm:$0xff]
  %v289 = vld [vmem:[%s2 + $0x48] sm:$0xff]
  %v290 = vld [vmem:[%s2 + $0x50] sm:$0xff]
  %v291 = vld [vmem:[%s2 + $0x58] sm:$0xff]
  %v292 = vld [vmem:[%s2 + $0x60] sm:$0xff]
  %v293 = vld [vmem:[%s2 + $0x68] sm:$0xff]
  %v294 = vld [vmem:[%s2 + $0x70] sm:$0xff]
  %v295 = vld [vmem:[%s2 + $0x78] sm:$0xff]
  %v296 = vld [vmem:[%s2 + $0x80] sm:$0xff]
  %v297 = vld [vmem:[%s2 + $0x88] sm:$0xff]
  %v298 = vld [vmem:[%s2 + $0x90] sm:$0xff]
  %v299 = vld [vmem:[%s2 + $0x98] sm:$0xff]
  %v300 = vld [vmem:[%s2 + $0xa0] sm:$0xff]
  %v301 = vld [vmem:[%s2 + $0xa8] sm:$0xff]
  %v302 = vld [vmem:[%s2 + $0xb0] sm:$0xff]
  %v303 = vld [vmem:[%s2 + $0xb8] sm:$0xff]
  %v304 = vld [vmem:[%s2 + $0xc0] sm:$0xff]
  %v305 = vld [vmem:[%s2 + $0xc8] sm:$0xff]
  %v306 = vld [vmem:[%s2 + $0xd0] sm:$0xff]
  %v307 = vld [vmem:[%s2 + $0xd8] sm:$0xff]
  %v308 = vld [vmem:[%s2 + $0xe0] sm:$0xff]
  %v309 = vld [vmem:[%s2 + $0xe8] sm:$0xff]
  %v310 = vld [vmem:[%s2 + $0xf0] sm:$0xff]
  %v311 = vld [vmem:[%s2 + $0xf8] sm:$0xff]
  %v312 = vld [vmem:[%s2 + $0x100] sm:$0xff]
  %v313 = vld [vmem:[%s2 + $0x108] sm:$0xff]
  %v314 = vld [vmem:[%s2 + $0x110] sm:$0xff]
  %v315 = vld [vmem:[%s2 + $0x118] sm:$0xff]
  %v316 = vld [vmem:[%s2 + $0x120] sm:$0xff]
  %v317 = vld [vmem:[%s2 + $0x128] sm:$0xff]
  %v318 = vld [vmem:[%s2 + $0x130] sm:$0xff]
  %v319 = vld [vmem:[%s2 + $0x138] sm:$0xff]
  %v320 = vld [vmem:[%s2 + $0x140] sm:$0xff]
  %v321 = vld [vmem:[%s2 + $0x148] sm:$0xff]
  %v322 = vld [vmem:[%s2 + $0x150] sm:$0xff]
  %v323 = vld [vmem:[%s2 + $0x158] sm:$0xff]
  %v324 = vld [vmem:[%s2 + $0x160] sm:$0xff]
  %v325 = vld [vmem:[%s2 + $0x168] sm:$0xff]
  %v326 = vld [vmem:[%s2 + $0x170] sm:$0xff]
  %v327 = vld [vmem:[%s2 + $0x178] sm:$0xff]
  %v328 = vld [vmem:[%s3 + $0x80] sm:$0x1]
  %329 = vmatprep.subr.mxu0 %v281
  %330 = vmatpush1.msra.mxu0 %v280
  %331 = vmatprep.subr.mxu0 %v284
  %332 = vmatpush1.msra.mxu0 %v283
  %333 = vmatprep.subr.mxu0 %v287
  %334 = vmatpush1.msra.mxu0 %v286
  %335 = vmatprep.subr.mxu0 %v290
  %336 = vmatpush1.msra.mxu0 %v289
  %337 = vmatprep.subr.mxu0 %v293
  %338 = vmatpush1.msra.mxu0 %v292
  %339 = vmatprep.subr.mxu0 %v296
  %340 = vmatpush1.msra.mxu0 %v295
  %341 = vmatprep.subr.mxu0 %v299
  %342 = vmatpush1.msra.mxu0 %v298
  %343 = vmatprep.subr.mxu0 %v302
  %344 = vmatpush1.msra.mxu0 %v301
  %345 = vmatprep.subr.mxu0 %v305
  %346 = vmatpush1.msra.mxu0 %v304
  %347 = vmatprep.subr.mxu0 %v308
  %348 = vmatpush1.msra.mxu0 %v307
  %349 = vmatprep.subr.mxu0 %v311
  %350 = vmatpush1.msra.mxu0 %v310
  %351 = vmatprep.subr.mxu0 %v314
  %352 = vmatpush1.msra.mxu0 %v313
  %353 = vmatprep.subr.mxu0 %v317
  %354 = vmatpush1.msra.mxu0 %v316
  %355 = vmatprep.subr.mxu0 %v320
  %356 = vmatpush1.msra.mxu0 %v319
  %357 = vmatprep.subr.mxu0 %v323
  %358 = vmatpush1.msra.mxu0 %v322
  %359 = vmatprep.subr.mxu0 %v326
  %360 = vmatpush1.msra.mxu0 %v325
  %361 = vmatprep.subr.mxu0 0.0
  %362 = vmatpush1.msra.mxu0 0.0
  %363 = vmatprep.subr.mxu0 0.0
  %364 = vmatpush1.msra.mxu0 0.0
  %365 = vmatprep.subr.mxu0 0.0
  %366 = vmatpush1.msra.mxu0 0.0
  %367 = vmatprep.subr.mxu0 0.0
  %368 = vmatpush1.msra.mxu0 0.0
  %369 = vmatprep.subr.mxu0 0.0
  %370 = vmatpush1.msra.mxu0 0.0
  %371 = vmatprep.subr.mxu0 0.0
  %372 = vmatpush1.msra.mxu0 0.0
  %373 = vmatprep.subr.mxu0 0.0
  %374 = vmatpush1.msra.mxu0 0.0
  %375 = vmatprep.subr.mxu0 0.0
  %376 = vmatpush1.msra.mxu0 0.0
  %377 = vmatprep.subr.mxu0 0.0
  %378 = vmatpush1.msra.mxu0 0.0
  %379 = vmatprep.subr.mxu0 0.0
  %380 = vmatpush1.msra.mxu0 0.0
  %381 = vmatprep.subr.mxu0 0.0
  %382 = vmatpush1.msra.mxu0 0.0
  %383 = vmatprep.subr.mxu0 0.0
  %384 = vmatpush1.msra.mxu0 0.0
  %385 = vmatprep.subr.mxu0 0.0
  %386 = vmatpush1.msra.mxu0 0.0
  %387 = vmatprep.subr.mxu0 0.0
  %388 = vmatpush1.msra.mxu0 0.0
  %389 = vmatprep.subr.mxu0 0.0
  %390 = vmatpush1.msra.mxu0 0.0
  %391 = vmatprep.subr.mxu0 0.0
  %392 = vmatpush1.msra.mxu0 0.0
  %393 = vmatprep.mubr.f32.mxu0 0.0
  %394 = vmatmul.mubr.f32.gmra.mrb[0].mxu0 0.0
  %v395 = vpop.f32.mrb[0].mxu0
  %v396 = vadd.f32 0.0, %v395
  %v397 = vpop.f32.mrb[0].mxu0
  %v398 = vadd.f32 0.0, %v397
  %399 = vdwg.mxu0
  %400 = vmatprep.subr.mxu0 0.0
  %401 = vmatpush1.msra.mxu0 %v282
  %402 = vmatprep.subr.mxu0 0.0
  %403 = vmatpush1.msra.mxu0 %v285
  %404 = vmatprep.subr.mxu0 0.0
  %405 = vmatpush1.msra.mxu0 %v288
  %406 = vmatprep.subr.mxu0 0.0
  %407 = vmatpush1.msra.mxu0 %v291
  %408 = vmatprep.subr.mxu0 0.0
  %409 = vmatpush1.msra.mxu0 %v294
  %410 = vmatprep.subr.mxu0 0.0
  %411 = vmatpush1.msra.mxu0 %v297
  %412 = vmatprep.subr.mxu0 0.0
  %413 = vmatpush1.msra.mxu0 %v300
  %414 = vmatprep.subr.mxu0 0.0
  %415 = vmatpush1.msra.mxu0 %v303
  %416 = vmatprep.subr.mxu0 0.0
  %417 = vmatpush1.msra.mxu0 %v306
  %418 = vmatprep.subr.mxu0 0.0
  %419 = vmatpush1.msra.mxu0 %v309
  %420 = vmatprep.subr.mxu0 0.0
  %421 = vmatpush1.msra.mxu0 %v312
  %422 = vmatprep.subr.mxu0 0.0
  %423 = vmatpush1.msra.mxu0 %v315
  %424 = vmatprep.subr.mxu0 0.0
  %425 = vmatpush1.msra.mxu0 %v318
  %426 = vmatprep.subr.mxu0 0.0
  %427 = vmatpush1.msra.mxu0 %v321
  %428 = vmatprep.subr.mxu0 0.0
  %429 = vmatpush1.msra.mxu0 %v324
  %430 = vmatprep.subr.mxu0 0.0
  %431 = vmatpush1.msra.mxu0 %v327
  %432 = vmatprep.subr.mxu0 0.0
  %433 = vmatpush1.msra.mxu0 0.0
  %434 = vmatprep.subr.mxu0 0.0
  %435 = vmatpush1.msra.mxu0 0.0
  %436 = vmatprep.subr.mxu0 0.0
  %437 = vmatpush1.msra.mxu0 0.0
  %438 = vmatprep.subr.mxu0 0.0
  %439 = vmatpush1.msra.mxu0 0.0
  %440 = vmatprep.subr.mxu0 0.0
  %441 = vmatpush1.msra.mxu0 0.0
  %442 = vmatprep.subr.mxu0 0.0
  %443 = vmatpush1.msra.mxu0 0.0
  %444 = vmatprep.subr.mxu0 0.0
  %445 = vmatpush1.msra.mxu0 0.0
  %446 = vmatprep.subr.mxu0 0.0
  %447 = vmatpush1.msra.mxu0 0.0
  %448 = vmatprep.subr.mxu0 0.0
  %449 = vmatpush1.msra.mxu0 0.0
  %450 = vmatprep.subr.mxu0 0.0
  %451 = vmatpush1.msra.mxu0 0.0
  %452 = vmatprep.subr.mxu0 0.0
  %453 = vmatpush1.msra.mxu0 0.0
  %454 = vmatprep.subr.mxu0 0.0
  %455 = vmatpush1.msra.mxu0 0.0
  %456 = vmatprep.subr.mxu0 0.0
  %457 = vmatpush1.msra.mxu0 0.0
  %458 = vmatprep.subr.mxu0 0.0
  %459 = vmatpush1.msra.mxu0 0.0
  %460 = vmatprep.subr.mxu0 0.0
  %461 = vmatpush1.msra.mxu0 0.0
  %462 = vmatprep.subr.mxu0 0.0
  %463 = vmatpush1.msra.mxu0 0.0
  %464 = vmatprep.mubr.f32.mxu0 0.0
  %465 = vmatmul.mubr.f32.gmra.mrb[0].mxu0 0.0
  %v466 = vpop.f32.mrb[0].mxu0
  %v467 = vadd.f32 0.0, %v466
  %v468 = vpop.f32.mrb[0].mxu0
  %469 = vdwg.mxu0
  %v470 = vadd.f32 %v129, %v396
  %v471 = vxor.u32 %v470, 2147483648
  %v472 = vmul.f32 %v471, 1.442695
  %v473 = vpow.pop %v472
  %v474 = vadd.f32 %v473, 1.0
  %v475 = vrcp.pop %v474
  %v476 = vmul.f32 1.0, %v475
  %v477 = vadd.f32 %v131, %v398
  %v478 = vxor.u32 %v477, 2147483648
  %v479 = vmul.f32 %v478, 1.442695
  %v480 = vpow.pop %v479
  %v481 = vadd.f32 %v480, 1.0
  %v482 = vrcp.pop %v481
  %v483 = vmul.f32 1.0, %v482
  %v484 = vlaneseq
  %v485 = vshrl.u32 %v484, 7
  %v486 = vsub.s32 0, %v485
  %v487 = vrot.slane %v328, %v486
  %v488 = vadd.f32 %v467, %v487
  %v489 = vmul.f32 %v476, %v488
  %v490 = vadd.f32 %v242, %v489
  %v491 = vtanh.pop %v490
  %v492 = vsub.f32 1.0, %v483
  %v493 = vmul.f32 %v492, %v491
  %v494 = vmul.f32 %v483, 0.0
  %v495 = vadd.f32 %v493, %v494
  %496 = vmatprep.subr.mxu0 %v281
  %497 = vmatpush1.msra.mxu0 %v280
  %498 = vmatprep.subr.mxu0 %v284
  %499 = vmatpush1.msra.mxu0 %v283
  %500 = vmatprep.subr.mxu0 %v287
  %501 = vmatpush1.msra.mxu0 %v286
  %502 = vmatprep.subr.mxu0 %v290
  %503 = vmatpush1.msra.mxu0 %v289
  %504 = vmatprep.subr.mxu0 %v293
  %505 = vmatpush1.msra.mxu0 %v292
  %506 = vmatprep.subr.mxu0 %v296
  %507 = vmatpush1.msra.mxu0 %v295
  %508 = vmatprep.subr.mxu0 %v299
  %509 = vmatpush1.msra.mxu0 %v298
  %510 = vmatprep.subr.mxu0 %v302
  %511 = vmatpush1.msra.mxu0 %v301
  %512 = vmatprep.subr.mxu0 %v305
  %513 = vmatpush1.msra.mxu0 %v304
  %514 = vmatprep.subr.mxu0 %v308
  %515 = vmatpush1.msra.mxu0 %v307
  %516 = vmatprep.subr.mxu0 %v311
  %517 = vmatpush1.msra.mxu0 %v310
  %518 = vmatprep.subr.mxu0 %v314
  %519 = vmatpush1.msra.mxu0 %v313
  %520 = vmatprep.subr.mxu0 %v317
  %521 = vmatpush1.msra.mxu0 %v316
  %522 = vmatprep.subr.mxu0 %v320
  %523 = vmatpush1.msra.mxu0 %v319
  %524 = vmatprep.subr.mxu0 %v323
  %525 = vmatpush1.msra.mxu0 %v322
  %526 = vmatprep.subr.mxu0 %v326
  %527 = vmatpush1.msra.mxu0 %v325
  %528 = vmatprep.subr.mxu0 0.0
  %529 = vmatpush1.msra.mxu0 0.0
  %530 = vmatprep.subr.mxu0 0.0
  %531 = vmatpush1.msra.mxu0 0.0
  %532 = vmatprep.subr.mxu0 0.0
  %533 = vmatpush1.msra.mxu0 0.0
  %534 = vmatprep.subr.mxu0 0.0
  %535 = vmatpush1.msra.mxu0 0.0
  %536 = vmatprep.subr.mxu0 0.0
  %537 = vmatpush1.msra.mxu0 0.0
  %538 = vmatprep.subr.mxu0 0.0
  %539 = vmatpush1.msra.mxu0 0.0
  %540 = vmatprep.subr.mxu0 0.0
  %541 = vmatpush1.msra.mxu0 0.0
  %542 = vmatprep.subr.mxu0 0.0
  %543 = vmatpush1.msra.mxu0 0.0
  %544 = vmatprep.subr.mxu0 0.0
  %545 = vmatpush1.msra.mxu0 0.0
  %546 = vmatprep.subr.mxu0 0.0
  %547 = vmatpush1.msra.mxu0 0.0
  %548 = vmatprep.subr.mxu0 0.0
  %549 = vmatpush1.msra.mxu0 0.0
  %550 = vmatprep.subr.mxu0 0.0
  %551 = vmatpush1.msra.mxu0 0.0
  %552 = vmatprep.subr.mxu0 0.0
  %553 = vmatpush1.msra.mxu0 0.0
  %554 = vmatprep.subr.mxu0 0.0
  %555 = vmatpush1.msra.mxu0 0.0
  %556 = vmatprep.subr.mxu0 0.0
  %557 = vmatpush1.msra.mxu0 0.0
  %558 = vmatprep.subr.mxu0 0.0
  %559 = vmatpush1.msra.mxu0 0.0
  %560 = vmatprep.mubr.f32.mxu0 0.0
  %561 = vmatmul.mubr.f32.gmra.mrb[0].mxu0 %v495
  %v562 = vpop.f32.mrb[0].mxu0
  %v563 = vadd.f32 0.0, %v562
  %v564 = vpop.f32.mrb[0].mxu0
  %v565 = vadd.f32 0.0, %v564
  %566 = vdwg.mxu0
  %567 = vmatprep.subr.mxu0 0.0
  %568 = vmatpush1.msra.mxu0 %v282
  %569 = vmatprep.subr.mxu0 0.0
  %570 = vmatpush1.msra.mxu0 %v285
  %571 = vmatprep.subr.mxu0 0.0
  %572 = vmatpush1.msra.mxu0 %v288
  %573 = vmatprep.subr.mxu0 0.0
  %574 = vmatpush1.msra.mxu0 %v291
  %575 = vmatprep.subr.mxu0 0.0
  %576 = vmatpush1.msra.mxu0 %v294
  %577 = vmatprep.subr.mxu0 0.0
  %578 = vmatpush1.msra.mxu0 %v297
  %579 = vmatprep.subr.mxu0 0.0
  %580 = vmatpush1.msra.mxu0 %v300
  %581 = vmatprep.subr.mxu0 0.0
  %582 = vmatpush1.msra.mxu0 %v303
  %583 = vmatprep.subr.mxu0 0.0
  %584 = vmatpush1.msra.mxu0 %v306
  %585 = vmatprep.subr.mxu0 0.0
  %586 = vmatpush1.msra.mxu0 %v309
  %587 = vmatprep.subr.mxu0 0.0
  %588 = vmatpush1.msra.mxu0 %v312
  %589 = vmatprep.subr.mxu0 0.0
  %590 = vmatpush1.msra.mxu0 %v315
  %591 = vmatprep.subr.mxu0 0.0
  %592 = vmatpush1.msra.mxu0 %v318
  %593 = vmatprep.subr.mxu0 0.0
  %594 = vmatpush1.msra.mxu0 %v321
  %595 = vmatprep.subr.mxu0 0.0
  %596 = vmatpush1.msra.mxu0 %v324
  %597 = vmatprep.subr.mxu0 0.0
  %598 = vmatpush1.msra.mxu0 %v327
  %599 = vmatprep.subr.mxu0 0.0
  %600 = vmatpush1.msra.mxu0 0.0
  %601 = vmatprep.subr.mxu0 0.0
  %602 = vmatpush1.msra.mxu0 0.0
  %603 = vmatprep.subr.mxu0 0.0
  %604 = vmatpush1.msra.mxu0 0.0
  %605 = vmatprep.subr.mxu0 0.0
  %606 = vmatpush1.msra.mxu0 0.0
  %607 = vmatprep.subr.mxu0 0.0
  %608 = vmatpush1.msra.mxu0 0.0
  %609 = vmatprep.subr.mxu0 0.0
  %610 = vmatpush1.msra.mxu0 0.0
  %611 = vmatprep.subr.mxu0 0.0
  %612 = vmatpush1.msra.mxu0 0.0
  %613 = vmatprep.subr.mxu0 0.0
  %614 = vmatpush1.msra.mxu0 0.0
  %615 = vmatprep.subr.mxu0 0.0
  %616 = vmatpush1.msra.mxu0 0.0
  %617 = vmatprep.subr.mxu0 0.0
  %618 = vmatpush1.msra.mxu0 0.0
  %619 = vmatprep.subr.mxu0 0.0
  %620 = vmatpush1.msra.mxu0 0.0
  %621 = vmatprep.subr.mxu0 0.0
  %622 = vmatpush1.msra.mxu0 0.0
  %623 = vmatprep.subr.mxu0 0.0
  %624 = vmatpush1.msra.mxu0 0.0
  %625 = vmatprep.subr.mxu0 0.0
  %626 = vmatpush1.msra.mxu0 0.0
  %627 = vmatprep.subr.mxu0 0.0
  %628 = vmatpush1.msra.mxu0 0.0
  %629 = vmatprep.subr.mxu0 0.0
  %630 = vmatpush1.msra.mxu0 0.0
  %631 = vmatprep.mubr.f32.mxu0 0.0
  %632 = vmatmul.mubr.f32.gmra.mrb[0].mxu0 %v495
  %v633 = vpop.f32.mrb[0].mxu0
  %v634 = vadd.f32 0.0, %v633
  %v635 = vpop.f32.mrb[0].mxu0
  %636 = vdwg.mxu0
  %v637 = vadd.f32 %v135, %v563
  %v638 = vxor.u32 %v637, 2147483648
  %v639 = vmul.f32 %v638, 1.442695
  %v640 = vpow.pop %v639
  %v641 = vadd.f32 %v640, 1.0
  %v642 = vrcp.pop %v641
  %v643 = vmul.f32 1.0, %v642
  %v644 = vadd.f32 %v137, %v565
  %v645 = vxor.u32 %v644, 2147483648
  %v646 = vmul.f32 %v645, 1.442695
  %v647 = vpow.pop %v646
  %v648 = vadd.f32 %v647, 1.0
  %v649 = vrcp.pop %v648
  %v650 = vmul.f32 1.0, %v649
  %v651 = vadd.f32 %v634, %v487
  %v652 = vmul.f32 %v643, %v651
  %v653 = vadd.f32 %v247, %v652
  %v654 = vtanh.pop %v653
  %v655 = vsub.f32 1.0, %v650
  %v656 = vmul.f32 %v655, %v654
  %v657 = vmul.f32 %v650, %v495
  %v658 = vadd.f32 %v656, %v657
  %659 = vmatprep.subr.mxu0 %v281
  %660 = vmatpush1.msra.mxu0 %v280
  %661 = vmatprep.subr.mxu0 %v284
  %662 = vmatpush1.msra.mxu0 %v283
  %663 = vmatprep.subr.mxu0 %v287
  %664 = vmatpush1.msra.mxu0 %v286
  %665 = vmatprep.subr.mxu0 %v290
  %666 = vmatpush1.msra.mxu0 %v289
  %667 = vmatprep.subr.mxu0 %v293
  %668 = vmatpush1.msra.mxu0 %v292
  %669 = vmatprep.subr.mxu0 %v296
  %670 = vmatpush1.msra.mxu0 %v295
  %671 = vmatprep.subr.mxu0 %v299
  %672 = vmatpush1.msra.mxu0 %v298
  %673 = vmatprep.subr.mxu0 %v302
  %674 = vmatpush1.msra.mxu0 %v301
  %675 = vmatprep.subr.mxu0 %v305
  %676 = vmatpush1.msra.mxu0 %v304
  %677 = vmatprep.subr.mxu0 %v308
  %678 = vmatpush1.msra.mxu0 %v307
  %679 = vmatprep.subr.mxu0 %v311
  %680 = vmatpush1.msra.mxu0 %v310
  %681 = vmatprep.subr.mxu0 %v314
  %682 = vmatpush1.msra.mxu0 %v313
  %683 = vmatprep.subr.mxu0 %v317
  %684 = vmatpush1.msra.mxu0 %v316
  %685 = vmatprep.subr.mxu0 %v320
  %686 = vmatpush1.msra.mxu0 %v319
  %687 = vmatprep.subr.mxu0 %v323
  %688 = vmatpush1.msra.mxu0 %v322
  %689 = vmatprep.subr.mxu0 %v326
  %690 = vmatpush1.msra.mxu0 %v325
  %691 = vmatprep.subr.mxu0 0.0
  %692 = vmatpush1.msra.mxu0 0.0
  %693 = vmatprep.subr.mxu0 0.0
  %694 = vmatpush1.msra.mxu0 0.0
  %695 = vmatprep.subr.mxu0 0.0
  %696 = vmatpush1.msra.mxu0 0.0
  %697 = vmatprep.subr.mxu0 0.0
  %698 = vmatpush1.msra.mxu0 0.0
  %699 = vmatprep.subr.mxu0 0.0
  %700 = vmatpush1.msra.mxu0 0.0
  %701 = vmatprep.subr.mxu0 0.0
  %702 = vmatpush1.msra.mxu0 0.0
  %703 = vmatprep.subr.mxu0 0.0
  %704 = vmatpush1.msra.mxu0 0.0
  %705 = vmatprep.subr.mxu0 0.0
  %706 = vmatpush1.msra.mxu0 0.0
  %707 = vmatprep.subr.mxu0 0.0
  %708 = vmatpush1.msra.mxu0 0.0
  %709 = vmatprep.subr.mxu0 0.0
  %710 = vmatpush1.msra.mxu0 0.0
  %711 = vmatprep.subr.mxu0 0.0
  %712 = vmatpush1.msra.mxu0 0.0
  %713 = vmatprep.subr.mxu0 0.0
  %714 = vmatpush1.msra.mxu0 0.0
  %715 = vmatprep.subr.mxu0 0.0
  %716 = vmatpush1.msra.mxu0 0.0
  %717 = vmatprep.subr.mxu0 0.0
  %718 = vmatpush1.msra.mxu0 0.0
  %719 = vmatprep.subr.mxu0 0.0
  %720 = vmatpush1.msra.mxu0 0.0
  %721 = vmatprep.subr.mxu0 0.0
  %722 = vmatpush1.msra.mxu0 0.0
  %723 = vmatprep.mubr.f32.mxu0 0.0
  %724 = vmatmul.mubr.f32.gmra.mrb[0].mxu0 %v658
  %v725 = vpop.f32.mrb[0].mxu0
  %v726 = vadd.f32 0.0, %v725
  %v727 = vpop.f32.mrb[0].mxu0
  %v728 = vadd.f32 0.0, %v727
  %729 = vdwg.mxu0
  %730 = vmatprep.subr.mxu0 0.0
  %731 = vmatpush1.msra.mxu0 %v282
  %732 = vmatprep.subr.mxu0 0.0
  %733 = vmatpush1.msra.mxu0 %v285
  %734 = vmatprep.subr.mxu0 0.0
  %735 = vmatpush1.msra.mxu0 %v288
  %736 = vmatprep.subr.mxu0 0.0
  %737 = vmatpush1.msra.mxu0 %v291
  %738 = vmatprep.subr.mxu0 0.0
  %739 = vmatpush1.msra.mxu0 %v294
  %740 = vmatprep.subr.mxu0 0.0
  %741 = vmatpush1.msra.mxu0 %v297
  %742 = vmatprep.subr.mxu0 0.0
  %743 = vmatpush1.msra.mxu0 %v300
  %744 = vmatprep.subr.mxu0 0.0
  %745 = vmatpush1.msra.mxu0 %v303
  %746 = vmatprep.subr.mxu0 0.0
  %747 = vmatpush1.msra.mxu0 %v306
  %748 = vmatprep.subr.mxu0 0.0
  %749 = vmatpush1.msra.mxu0 %v309
  %750 = vmatprep.subr.mxu0 0.0
  %751 = vmatpush1.msra.mxu0 %v312
  %752 = vmatprep.subr.mxu0 0.0
  %753 = vmatpush1.msra.mxu0 %v315
  %754 = vmatprep.subr.mxu0 0.0
  %755 = vmatpush1.msra.mxu0 %v318
  %756 = vmatprep.subr.mxu0 0.0
  %757 = vmatpush1.msra.mxu0 %v321
  %758 = vmatprep.subr.mxu0 0.0
  %759 = vmatpush1.msra.mxu0 %v324
  %760 = vmatprep.subr.mxu0 0.0
  %761 = vmatpush1.msra.mxu0 %v327
  %762 = vmatprep.subr.mxu0 0.0
  %763 = vmatpush1.msra.mxu0 0.0
  %764 = vmatprep.subr.mxu0 0.0
  %765 = vmatpush1.msra.mxu0 0.0
  %766 = vmatprep.subr.mxu0 0.0
  %767 = vmatpush1.msra.mxu0 0.0
  %768 = vmatprep.subr.mxu0 0.0
  %769 = vmatpush1.msra.mxu0 0.0
  %770 = vmatprep.subr.mxu0 0.0
  %771 = vmatpush1.msra.mxu0 0.0
  %772 = vmatprep.subr.mxu0 0.0
  %773 = vmatpush1.msra.mxu0 0.0
  %774 = vmatprep.subr.mxu0 0.0
  %775 = vmatpush1.msra.mxu0 0.0
  %776 = vmatprep.subr.mxu0 0.0
  %777 = vmatpush1.msra.mxu0 0.0
  %778 = vmatprep.subr.mxu0 0.0
  %779 = vmatpush1.msra.mxu0 0.0
  %780 = vmatprep.subr.mxu0 0.0
  %781 = vmatpush1.msra.mxu0 0.0
  %782 = vmatprep.subr.mxu0 0.0
  %783 = vmatpush1.msra.mxu0 0.0
  %784 = vmatprep.subr.mxu0 0.0
  %785 = vmatpush1.msra.mxu0 0.0
  %786 = vmatprep.subr.mxu0 0.0
  %787 = vmatpush1.msra.mxu0 0.0
  %788 = vmatprep.subr.mxu0 0.0
  %789 = vmatpush1.msra.mxu0 0.0
  %790 = vmatprep.subr.mxu0 0.0
  %791 = vmatpush1.msra.mxu0 0.0
  %792 = vmatprep.subr.mxu0 0.0
  %793 = vmatpush1.msra.mxu0 0.0
  %794 = vmatprep.mubr.f32.mxu0 0.0
  %795 = vmatmul.mubr.f32.gmra.mrb[0].mxu0 %v658
  %v796 = vpop.f32.mrb[0].mxu0
  %v797 = vadd.f32 0.0, %v796
  %v798 = vpop.f32.mrb[0].mxu0
  %799 = vdwg.mxu0
  %v800 = vadd.f32 %v141, %v726
  %v801 = vxor.u32 %v800, 2147483648
  %v802 = vmul.f32 %v801, 1.442695
  %v803 = vpow.pop %v802
  %v804 = vadd.f32 %v803, 1.0
  %v805 = vrcp.pop %v804
  %v806 = vmul.f32 1.0, %v805
  %v807 = vadd.f32 %v143, %v728
  %v808 = vxor.u32 %v807, 2147483648
  %v809 = vmul.f32 %v808, 1.442695
  %v810 = vpow.pop %v809
  %v811 = vadd.f32 %v810, 1.0
  %v812 = vrcp.pop %v811
  %v813 = vmul.f32 1.0, %v812
  %v814 = vadd.f32 %v797, %v487
  %v815 = vmul.f32 %v806, %v814
  %v816 = vadd.f32 %v252, %v815
  %v817 = vtanh.pop %v816
  %v818 = vsub.f32 1.0, %v813
  %v819 = vmul.f32 %v818, %v817
  %v820 = vmul.f32 %v813, %v658
  %v821 = vadd.f32 %v819, %v820
  %822 = vmatprep.subr.mxu0 %v281
  %823 = vmatpush1.msra.mxu0 %v280
  %824 = vmatprep.subr.mxu0 %v284
  %825 = vmatpush1.msra.mxu0 %v283
  %826 = vmatprep.subr.mxu0 %v287
  %827 = vmatpush1.msra.mxu0 %v286
  %828 = vmatprep.subr.mxu0 %v290
  %829 = vmatpush1.msra.mxu0 %v289
  %830 = vmatprep.subr.mxu0 %v293
  %831 = vmatpush1.msra.mxu0 %v292
  %832 = vmatprep.subr.mxu0 %v296
  %833 = vmatpush1.msra.mxu0 %v295
  %834 = vmatprep.subr.mxu0 %v299
  %835 = vmatpush1.msra.mxu0 %v298
  %836 = vmatprep.subr.mxu0 %v302
  %837 = vmatpush1.msra.mxu0 %v301
  %838 = vmatprep.subr.mxu0 %v305
  %839 = vmatpush1.msra.mxu0 %v304
  %840 = vmatprep.subr.mxu0 %v308
  %841 = vmatpush1.msra.mxu0 %v307
  %842 = vmatprep.subr.mxu0 %v311
  %843 = vmatpush1.msra.mxu0 %v310
  %844 = vmatprep.subr.mxu0 %v314
  %845 = vmatpush1.msra.mxu0 %v313
  %846 = vmatprep.subr.mxu0 %v317
  %847 = vmatpush1.msra.mxu0 %v316
  %848 = vmatprep.subr.mxu0 %v320
  %849 = vmatpush1.msra.mxu0 %v319
  %850 = vmatprep.subr.mxu0 %v323
  %851 = vmatpush1.msra.mxu0 %v322
  %852 = vmatprep.subr.mxu0 %v326
  %853 = vmatpush1.msra.mxu0 %v325
  %854 = vmatprep.subr.mxu0 0.0
  %855 = vmatpush1.msra.mxu0 0.0
  %856 = vmatprep.subr.mxu0 0.0
  %857 = vmatpush1.msra.mxu0 0.0
  %858 = vmatprep.subr.mxu0 0.0
  %859 = vmatpush1.msra.mxu0 0.0
  %860 = vmatprep.subr.mxu0 0.0
  %861 = vmatpush1.msra.mxu0 0.0
  %862 = vmatprep.subr.mxu0 0.0
  %863 = vmatpush1.msra.mxu0 0.0
  %864 = vmatprep.subr.mxu0 0.0
  %865 = vmatpush1.msra.mxu0 0.0
  %866 = vmatprep.subr.mxu0 0.0
  %867 = vmatpush1.msra.mxu0 0.0
  %868 = vmatprep.subr.mxu0 0.0
  %869 = vmatpush1.msra.mxu0 0.0
  %870 = vmatprep.subr.mxu0 0.0
  %871 = vmatpush1.msra.mxu0 0.0
  %872 = vmatprep.subr.mxu0 0.0
  %873 = vmatpush1.msra.mxu0 0.0
  %874 = vmatprep.subr.mxu0 0.0
  %875 = vmatpush1.msra.mxu0 0.0
  %876 = vmatprep.subr.mxu0 0.0
  %877 = vmatpush1.msra.mxu0 0.0
  %878 = vmatprep.subr.mxu0 0.0
  %879 = vmatpush1.msra.mxu0 0.0
  %880 = vmatprep.subr.mxu0 0.0
  %881 = vmatpush1.msra.mxu0 0.0
  %882 = vmatprep.subr.mxu0 0.0
  %883 = vmatpush1.msra.mxu0 0.0
  %884 = vmatprep.subr.mxu0 0.0
  %885 = vmatpush1.msra.mxu0 0.0
  %886 = vmatprep.mubr.f32.mxu0 0.0
  %887 = vmatmul.mubr.f32.gmra.mrb[0].mxu0 %v821
  %v888 = vpop.f32.mrb[0].mxu0
  %v889 = vadd.f32 0.0, %v888
  %v890 = vpop.f32.mrb[0].mxu0
  %v891 = vadd.f32 0.0, %v890
  %892 = vdwg.mxu0
  %893 = vmatprep.subr.mxu0 0.0
  %894 = vmatpush1.msra.mxu0 %v282
  %895 = vmatprep.subr.mxu0 0.0
  %896 = vmatpush1.msra.mxu0 %v285
  %897 = vmatprep.subr.mxu0 0.0
  %898 = vmatpush1.msra.mxu0 %v288
  %899 = vmatprep.subr.mxu0 0.0
  %900 = vmatpush1.msra.mxu0 %v291
  %901 = vmatprep.subr.mxu0 0.0
  %902 = vmatpush1.msra.mxu0 %v294
  %903 = vmatprep.subr.mxu0 0.0
  %904 = vmatpush1.msra.mxu0 %v297
  %905 = vmatprep.subr.mxu0 0.0
  %906 = vmatpush1.msra.mxu0 %v300
  %907 = vmatprep.subr.mxu0 0.0
  %908 = vmatpush1.msra.mxu0 %v303
  %909 = vmatprep.subr.mxu0 0.0
  %910 = vmatpush1.msra.mxu0 %v306
  %911 = vmatprep.subr.mxu0 0.0
  %912 = vmatpush1.msra.mxu0 %v309
  %913 = vmatprep.subr.mxu0 0.0
  %914 = vmatpush1.msra.mxu0 %v312
  %915 = vmatprep.subr.mxu0 0.0
  %916 = vmatpush1.msra.mxu0 %v315
  %917 = vmatprep.subr.mxu0 0.0
  %918 = vmatpush1.msra.mxu0 %v318
  %919 = vmatprep.subr.mxu0 0.0
  %920 = vmatpush1.msra.mxu0 %v321
  %921 = vmatprep.subr.mxu0 0.0
  %922 = vmatpush1.msra.mxu0 %v324
  %923 = vmatprep.subr.mxu0 0.0
  %924 = vmatpush1.msra.mxu0 %v327
  %925 = vmatprep.subr.mxu0 0.0
  %926 = vmatpush1.msra.mxu0 0.0
  %927 = vmatprep.subr.mxu0 0.0
  %928 = vmatpush1.msra.mxu0 0.0
  %929 = vmatprep.subr.mxu0 0.0
  %930 = vmatpush1.msra.mxu0 0.0
  %931 = vmatprep.subr.mxu0 0.0
  %932 = vmatpush1.msra.mxu0 0.0
  %933 = vmatprep.subr.mxu0 0.0
  %934 = vmatpush1.msra.mxu0 0.0
  %935 = vmatprep.subr.mxu0 0.0
  %936 = vmatpush1.msra.mxu0 0.0
  %937 = vmatprep.subr.mxu0 0.0
  %938 = vmatpush1.msra.mxu0 0.0
  %939 = vmatprep.subr.mxu0 0.0
  %940 = vmatpush1.msra.mxu0 0.0
  %941 = vmatprep.subr.mxu0 0.0
  %942 = vmatpush1.msra.mxu0 0.0
  %943 = vmatprep.subr.mxu0 0.0
  %944 = vmatpush1.msra.mxu0 0.0
  %945 = vmatprep.subr.mxu0 0.0
  %946 = vmatpush1.msra.mxu0 0.0
  %947 = vmatprep.subr.mxu0 0.0
  %948 = vmatpush1.msra.mxu0 0.0
  %949 = vmatprep.subr.mxu0 0.0
  %950 = vmatpush1.msra.mxu0 0.0
  %951 = vmatprep.subr.mxu0 0.0
  %952 = vmatpush1.msra.mxu0 0.0
  %953 = vmatprep.subr.mxu0 0.0
  %954 = vmatpush1.msra.mxu0 0.0
  %955 = vmatprep.subr.mxu0 0.0
  %956 = vmatpush1.msra.mxu0 0.0
  %957 = vmatprep.mubr.f32.mxu0 0.0
  %958 = vmatmul.mubr.f32.gmra.mrb[0].mxu0 %v821
  %v959 = vpop.f32.mrb[0].mxu0
  %v960 = vadd.f32 0.0, %v959
  %v961 = vpop.f32.mrb[0].mxu0
  %962 = vdwg.mxu0
  %v963 = vadd.f32 %v147, %v889
  %v964 = vxor.u32 %v963, 2147483648
  %v965 = vmul.f32 %v964, 1.442695
  %v966 = vpow.pop %v965
  %v967 = vadd.f32 %v966, 1.0
  %v968 = vrcp.pop %v967
  %v969 = vmul.f32 1.0, %v968
  %v970 = vadd.f32 %v149, %v891
  %v971 = vxor.u32 %v970, 2147483648
  %v972 = vmul.f32 %v971, 1.442695
  %v973 = vpow.pop %v972
  %v974 = vadd.f32 %v973, 1.0
  %v975 = vrcp.pop %v974
  %v976 = vmul.f32 1.0, %v975
  %v977 = vadd.f32 %v960, %v487
  %v978 = vmul.f32 %v969, %v977
  %v979 = vadd.f32 %v257, %v978
  %v980 = vtanh.pop %v979
  %v981 = vsub.f32 1.0, %v976
  %v982 = vmul.f32 %v981, %v980
  %v983 = vmul.f32 %v976, %v821
  %v984 = vadd.f32 %v982, %v983
  %985 = vmatprep.subr.mxu0 %v281
  %986 = vmatpush1.msra.mxu0 %v280
  %987 = vmatprep.subr.mxu0 %v284
  %988 = vmatpush1.msra.mxu0 %v283
  %989 = vmatprep.subr.mxu0 %v287
  %990 = vmatpush1.msra.mxu0 %v286
  %991 = vmatprep.subr.mxu0 %v290
  %992 = vmatpush1.msra.mxu0 %v289
  %993 = vmatprep.subr.mxu0 %v293
  %994 = vmatpush1.msra.mxu0 %v292
  %995 = vmatprep.subr.mxu0 %v296
  %996 = vmatpush1.msra.mxu0 %v295
  %997 = vmatprep.subr.mxu0 %v299
  %998 = vmatpush1.msra.mxu0 %v298
  %999 = vmatprep.subr.mxu0 %v302
  %1000 = vmatpush1.msra.mxu0 %v301
  %1001 = vmatprep.subr.mxu0 %v305
  %1002 = vmatpush1.msra.mxu0 %v304
  %1003 = vmatprep.subr.mxu0 %v308
  %1004 = vmatpush1.msra.mxu0 %v307
  %1005 = vmatprep.subr.mxu0 %v311
  %1006 = vmatpush1.msra.mxu0 %v310
  %1007 = vmatprep.subr.mxu0 %v314
  %1008 = vmatpush1.msra.mxu0 %v313
  %1009 = vmatprep.subr.mxu0 %v317
  %1010 = vmatpush1.msra.mxu0 %v316
  %1011 = vmatprep.subr.mxu0 %v320
  %1012 = vmatpush1.msra.mxu0 %v319
  %1013 = vmatprep.subr.mxu0 %v323
  %1014 = vmatpush1.msra.mxu0 %v322
  %1015 = vmatprep.subr.mxu0 %v326
  %1016 = vmatpush1.msra.mxu0 %v325
  %1017 = vmatprep.subr.mxu0 0.0
  %1018 = vmatpush1.msra.mxu0 0.0
  %1019 = vmatprep.subr.mxu0 0.0
  %1020 = vmatpush1.msra.mxu0 0.0
  %1021 = vmatprep.subr.mxu0 0.0
  %1022 = vmatpush1.msra.mxu0 0.0
  %1023 = vmatprep.subr.mxu0 0.0
  %1024 = vmatpush1.msra.mxu0 0.0
  %1025 = vmatprep.subr.mxu0 0.0
  %1026 = vmatpush1.msra.mxu0 0.0
  %1027 = vmatprep.subr.mxu0 0.0
  %1028 = vmatpush1.msra.mxu0 0.0
  %1029 = vmatprep.subr.mxu0 0.0
  %1030 = vmatpush1.msra.mxu0 0.0
  %1031 = vmatprep.subr.mxu0 0.0
  %1032 = vmatpush1.msra.mxu0 0.0
  %1033 = vmatprep.subr.mxu0 0.0
  %1034 = vmatpush1.msra.mxu0 0.0
  %1035 = vmatprep.subr.mxu0 0.0
  %1036 = vmatpush1.msra.mxu0 0.0
  %1037 = vmatprep.subr.mxu0 0.0
  %1038 = vmatpush1.msra.mxu0 0.0
  %1039 = vmatprep.subr.mxu0 0.0
  %1040 = vmatpush1.msra.mxu0 0.0
  %1041 = vmatprep.subr.mxu0 0.0
  %1042 = vmatpush1.msra.mxu0 0.0
  %1043 = vmatprep.subr.mxu0 0.0
  %1044 = vmatpush1.msra.mxu0 0.0
  %1045 = vmatprep.subr.mxu0 0.0
  %1046 = vmatpush1.msra.mxu0 0.0
  %1047 = vmatprep.subr.mxu0 0.0
  %1048 = vmatpush1.msra.mxu0 0.0
  %1049 = vmatprep.mubr.f32.mxu0 0.0
  %1050 = vmatmul.mubr.f32.gmra.mrb[0].mxu0 %v984
  %v1051 = vpop.f32.mrb[0].mxu0
  %v1052 = vadd.f32 0.0, %v1051
  %v1053 = vpop.f32.mrb[0].mxu0
  %v1054 = vadd.f32 0.0, %v1053
  %1055 = vdwg.mxu0
  %1056 = vmatprep.subr.mxu0 0.0
  %1057 = vmatpush1.msra.mxu0 %v282
  %1058 = vmatprep.subr.mxu0 0.0
  %1059 = vmatpush1.msra.mxu0 %v285
  %1060 = vmatprep.subr.mxu0 0.0
  %1061 = vmatpush1.msra.mxu0 %v288
  %1062 = vmatprep.subr.mxu0 0.0
  %1063 = vmatpush1.msra.mxu0 %v291
  %1064 = vmatprep.subr.mxu0 0.0
  %1065 = vmatpush1.msra.mxu0 %v294
  %1066 = vmatprep.subr.mxu0 0.0
  %1067 = vmatpush1.msra.mxu0 %v297
  %1068 = vmatprep.subr.mxu0 0.0
  %1069 = vmatpush1.msra.mxu0 %v300
  %1070 = vmatprep.subr.mxu0 0.0
  %1071 = vmatpush1.msra.mxu0 %v303
  %1072 = vmatprep.subr.mxu0 0.0
  %1073 = vmatpush1.msra.mxu0 %v306
  %1074 = vmatprep.subr.mxu0 0.0
  %1075 = vmatpush1.msra.mxu0 %v309
  %1076 = vmatprep.subr.mxu0 0.0
  %1077 = vmatpush1.msra.mxu0 %v312
  %1078 = vmatprep.subr.mxu0 0.0
  %1079 = vmatpush1.msra.mxu0 %v315
  %1080 = vmatprep.subr.mxu0 0.0
  %1081 = vmatpush1.msra.mxu0 %v318
  %1082 = vmatprep.subr.mxu0 0.0
  %1083 = vmatpush1.msra.mxu0 %v321
  %1084 = vmatprep.subr.mxu0 0.0
  %1085 = vmatpush1.msra.mxu0 %v324
  %1086 = vmatprep.subr.mxu0 0.0
  %1087 = vmatpush1.msra.mxu0 %v327
  %1088 = vmatprep.subr.mxu0 0.0
  %1089 = vmatpush1.msra.mxu0 0.0
  %1090 = vmatprep.subr.mxu0 0.0
  %1091 = vmatpush1.msra.mxu0 0.0
  %1092 = vmatprep.subr.mxu0 0.0
  %1093 = vmatpush1.msra.mxu0 0.0
  %1094 = vmatprep.subr.mxu0 0.0
  %1095 = vmatpush1.msra.mxu0 0.0
  %1096 = vmatprep.subr.mxu0 0.0
  %1097 = vmatpush1.msra.mxu0 0.0
  %1098 = vmatprep.subr.mxu0 0.0
  %1099 = vmatpush1.msra.mxu0 0.0
  %1100 = vmatprep.subr.mxu0 0.0
  %1101 = vmatpush1.msra.mxu0 0.0
  %1102 = vmatprep.subr.mxu0 0.0
  %1103 = vmatpush1.msra.mxu0 0.0
  %1104 = vmatprep.subr.mxu0 0.0
  %1105 = vmatpush1.msra.mxu0 0.0
  %1106 = vmatprep.subr.mxu0 0.0
  %1107 = vmatpush1.msra.mxu0 0.0
  %1108 = vmatprep.subr.mxu0 0.0
  %1109 = vmatpush1.msra.mxu0 0.0
  %1110 = vmatprep.subr.mxu0 0.0
  %1111 = vmatpush1.msra.mxu0 0.0
  %1112 = vmatprep.subr.mxu0 0.0
  %1113 = vmatpush1.msra.mxu0 0.0
  %1114 = vmatprep.subr.mxu0 0.0
  %1115 = vmatpush1.msra.mxu0 0.0
  %1116 = vmatprep.subr.mxu0 0.0
  %1117 = vmatpush1.msra.mxu0 0.0
  %1118 = vmatprep.subr.mxu0 0.0
  %1119 = vmatpush1.msra.mxu0 0.0
  %1120 = vmatprep.mubr.f32.mxu0 0.0
  %1121 = vmatmul.mubr.f32.gmra.mrb[0].mxu0 %v984
  %v1122 = vpop.f32.mrb[0].mxu0
  %v1123 = vadd.f32 0.0, %v1122
  %v1124 = vpop.f32.mrb[0].mxu0
  %1125 = vdwg.mxu0
  %v1126 = vadd.f32 %v153, %v1052
  %v1127 = vxor.u32 %v1126, 2147483648
  %v1128 = vmul.f32 %v1127, 1.442695
  %v1129 = vpow.pop %v1128
  %v1130 = vadd.f32 %v1129, 1.0
  %v1131 = vrcp.pop %v1130
  %v1132 = vmul.f32 1.0, %v1131
  %v1133 = vadd.f32 %v155, %v1054
  %v1134 = vxor.u32 %v1133, 2147483648
  %v1135 = vmul.f32 %v1134, 1.442695
  %v1136 = vpow.pop %v1135
  %v1137 = vadd.f32 %v1136, 1.0
  %v1138 = vrcp.pop %v1137
  %v1139 = vmul.f32 1.0, %v1138
  %v1140 = vadd.f32 %v1123, %v487
  %v1141 = vmul.f32 %v1132, %v1140
  %v1142 = vadd.f32 %v262, %v1141
  %v1143 = vtanh.pop %v1142
  %v1144 = vsub.f32 1.0, %v1139
  %v1145 = vmul.f32 %v1144, %v1143
  %v1146 = vmul.f32 %v1139, %v984
  %v1147 = vadd.f32 %v1145, %v1146
  %1148 = vmatprep.subr.mxu0 %v281
  %1149 = vmatpush1.msra.mxu0 %v280
  %1150 = vmatprep.subr.mxu0 %v284
  %1151 = vmatpush1.msra.mxu0 %v283
  %1152 = vmatprep.subr.mxu0 %v287
  %1153 = vmatpush1.msra.mxu0 %v286
  %1154 = vmatprep.subr.mxu0 %v290
  %1155 = vmatpush1.msra.mxu0 %v289
  %1156 = vmatprep.subr.mxu0 %v293
  %1157 = vmatpush1.msra.mxu0 %v292
  %1158 = vmatprep.subr.mxu0 %v296
  %1159 = vmatpush1.msra.mxu0 %v295
  %1160 = vmatprep.subr.mxu0 %v299
  %1161 = vmatpush1.msra.mxu0 %v298
  %1162 = vmatprep.subr.mxu0 %v302
  %1163 = vmatpush1.msra.mxu0 %v301
  %1164 = vmatprep.subr.mxu0 %v305
  %1165 = vmatpush1.msra.mxu0 %v304
  %1166 = vmatprep.subr.mxu0 %v308
  %1167 = vmatpush1.msra.mxu0 %v307
  %1168 = vmatprep.subr.mxu0 %v311
  %1169 = vmatpush1.msra.mxu0 %v310
  %1170 = vmatprep.subr.mxu0 %v314
  %1171 = vmatpush1.msra.mxu0 %v313
  %1172 = vmatprep.subr.mxu0 %v317
  %1173 = vmatpush1.msra.mxu0 %v316
  %1174 = vmatprep.subr.mxu0 %v320
  %1175 = vmatpush1.msra.mxu0 %v319
  %1176 = vmatprep.subr.mxu0 %v323
  %1177 = vmatpush1.msra.mxu0 %v322
  %1178 = vmatprep.subr.mxu0 %v326
  %1179 = vmatpush1.msra.mxu0 %v325
  %1180 = vmatprep.subr.mxu0 0.0
  %1181 = vmatpush1.msra.mxu0 0.0
  %1182 = vmatprep.subr.mxu0 0.0
  %1183 = vmatpush1.msra.mxu0 0.0
  %1184 = vmatprep.subr.mxu0 0.0
  %1185 = vmatpush1.msra.mxu0 0.0
  %1186 = vmatprep.subr.mxu0 0.0
  %1187 = vmatpush1.msra.mxu0 0.0
  %1188 = vmatprep.subr.mxu0 0.0
  %1189 = vmatpush1.msra.mxu0 0.0
  %1190 = vmatprep.subr.mxu0 0.0
  %1191 = vmatpush1.msra.mxu0 0.0
  %1192 = vmatprep.subr.mxu0 0.0
  %1193 = vmatpush1.msra.mxu0 0.0
  %1194 = vmatprep.subr.mxu0 0.0
  %1195 = vmatpush1.msra.mxu0 0.0
  %1196 = vmatprep.subr.mxu0 0.0
  %1197 = vmatpush1.msra.mxu0 0.0
  %1198 = vmatprep.subr.mxu0 0.0
  %1199 = vmatpush1.msra.mxu0 0.0
  %1200 = vmatprep.subr.mxu0 0.0
  %1201 = vmatpush1.msra.mxu0 0.0
  %1202 = vmatprep.subr.mxu0 0.0
  %1203 = vmatpush1.msra.mxu0 0.0
  %1204 = vmatprep.subr.mxu0 0.0
  %1205 = vmatpush1.msra.mxu0 0.0
  %1206 = vmatprep.subr.mxu0 0.0
  %1207 = vmatpush1.msra.mxu0 0.0
  %1208 = vmatprep.subr.mxu0 0.0
  %1209 = vmatpush1.msra.mxu0 0.0
  %1210 = vmatprep.subr.mxu0 0.0
  %1211 = vmatpush1.msra.mxu0 0.0
  %1212 = vmatprep.mubr.f32.mxu0 0.0
  %1213 = vmatmul.mubr.f32.gmra.mrb[0].mxu0 %v1147
  %v1214 = vpop.f32.mrb[0].mxu0
  %v1215 = vadd.f32 0.0, %v1214
  %v1216 = vpop.f32.mrb[0].mxu0
  %v1217 = vadd.f32 0.0, %v1216
  %1218 = vdwg.mxu0
  %1219 = vmatprep.subr.mxu0 0.0
  %1220 = vmatpush1.msra.mxu0 %v282
  %1221 = vmatprep.subr.mxu0 0.0
  %1222 = vmatpush1.msra.mxu0 %v285
  %1223 = vmatprep.subr.mxu0 0.0
  %1224 = vmatpush1.msra.mxu0 %v288
  %1225 = vmatprep.subr.mxu0 0.0
  %1226 = vmatpush1.msra.mxu0 %v291
  %1227 = vmatprep.subr.mxu0 0.0
  %1228 = vmatpush1.msra.mxu0 %v294
  %1229 = vmatprep.subr.mxu0 0.0
  %1230 = vmatpush1.msra.mxu0 %v297
  %1231 = vmatprep.subr.mxu0 0.0
  %1232 = vmatpush1.msra.mxu0 %v300
  %1233 = vmatprep.subr.mxu0 0.0
  %1234 = vmatpush1.msra.mxu0 %v303
  %1235 = vmatprep.subr.mxu0 0.0
  %1236 = vmatpush1.msra.mxu0 %v306
  %1237 = vmatprep.subr.mxu0 0.0
  %1238 = vmatpush1.msra.mxu0 %v309
  %1239 = vmatprep.subr.mxu0 0.0
  %1240 = vmatpush1.msra.mxu0 %v312
  %1241 = vmatprep.subr.mxu0 0.0
  %1242 = vmatpush1.msra.mxu0 %v315
  %1243 = vmatprep.subr.mxu0 0.0
  %1244 = vmatpush1.msra.mxu0 %v318
  %1245 = vmatprep.subr.mxu0 0.0
  %1246 = vmatpush1.msra.mxu0 %v321
  %1247 = vmatprep.subr.mxu0 0.0
  %1248 = vmatpush1.msra.mxu0 %v324
  %1249 = vmatprep.subr.mxu0 0.0
  %1250 = vmatpush1.msra.mxu0 %v327
  %1251 = vmatprep.subr.mxu0 0.0
  %1252 = vmatpush1.msra.mxu0 0.0
  %1253 = vmatprep.subr.mxu0 0.0
  %1254 = vmatpush1.msra.mxu0 0.0
  %1255 = vmatprep.subr.mxu0 0.0
  %1256 = vmatpush1.msra.mxu0 0.0
  %1257 = vmatprep.subr.mxu0 0.0
  %1258 = vmatpush1.msra.mxu0 0.0
  %1259 = vmatprep.subr.mxu0 0.0
  %1260 = vmatpush1.msra.mxu0 0.0
  %1261 = vmatprep.subr.mxu0 0.0
  %1262 = vmatpush1.msra.mxu0 0.0
  %1263 = vmatprep.subr.mxu0 0.0
  %1264 = vmatpush1.msra.mxu0 0.0
  %1265 = vmatprep.subr.mxu0 0.0
  %1266 = vmatpush1.msra.mxu0 0.0
  %1267 = vmatprep.subr.mxu0 0.0
  %1268 = vmatpush1.msra.mxu0 0.0
  %1269 = vmatprep.subr.mxu0 0.0
  %1270 = vmatpush1.msra.mxu0 0.0
  %1271 = vmatprep.subr.mxu0 0.0
  %1272 = vmatpush1.msra.mxu0 0.0
  %1273 = vmatprep.subr.mxu0 0.0
  %1274 = vmatpush1.msra.mxu0 0.0
  %1275 = vmatprep.subr.mxu0 0.0
  %1276 = vmatpush1.msra.mxu0 0.0
  %1277 = vmatprep.subr.mxu0 0.0
  %1278 = vmatpush1.msra.mxu0 0.0
  %1279 = vmatprep.subr.mxu0 0.0
  %1280 = vmatpush1.msra.mxu0 0.0
  %1281 = vmatprep.subr.mxu0 0.0
  %1282 = vmatpush1.msra.mxu0 0.0
  %1283 = vmatprep.mubr.f32.mxu0 0.0
  %1284 = vmatmul.mubr.f32.gmra.mrb[0].mxu0 %v1147
  %v1285 = vpop.f32.mrb[0].mxu0
  %v1286 = vadd.f32 0.0, %v1285
  %v1287 = vpop.f32.mrb[0].mxu0
  %1288 = vdwg.mxu0
  %v1289 = vadd.f32 %v159, %v1215
  %v1290 = vxor.u32 %v1289, 2147483648
  %v1291 = vmul.f32 %v1290, 1.442695
  %v1292 = vpow.pop %v1291
  %v1293 = vadd.f32 %v1292, 1.0
  %v1294 = vrcp.pop %v1293
  %v1295 = vmul.f32 1.0, %v1294
  %v1296 = vadd.f32 %v161, %v1217
  %v1297 = vxor.u32 %v1296, 2147483648
  %v1298 = vmul.f32 %v1297, 1.442695
  %v1299 = vpow.pop %v1298
  %v1300 = vadd.f32 %v1299, 1.0
  %v1301 = vrcp.pop %v1300
  %v1302 = vmul.f32 1.0, %v1301
  %v1303 = vadd.f32 %v1286, %v487
  %v1304 = vmul.f32 %v1295, %v1303
  %v1305 = vadd.f32 %v267, %v1304
  %v1306 = vtanh.pop %v1305
  %v1307 = vsub.f32 1.0, %v1302
  %v1308 = vmul.f32 %v1307, %v1306
  %v1309 = vmul.f32 %v1302, %v1147
  %v1310 = vadd.f32 %v1308, %v1309
  %1311 = vmatprep.subr.mxu0 %v281
  %1312 = vmatpush1.msra.mxu0 %v280
  %1313 = vmatprep.subr.mxu0 %v284
  %1314 = vmatpush1.msra.mxu0 %v283
  %1315 = vmatprep.subr.mxu0 %v287
  %1316 = vmatpush1.msra.mxu0 %v286
  %1317 = vmatprep.subr.mxu0 %v290
  %1318 = vmatpush1.msra.mxu0 %v289
  %1319 = vmatprep.subr.mxu0 %v293
  %1320 = vmatpush1.msra.mxu0 %v292
  %1321 = vmatprep.subr.mxu0 %v296
  %1322 = vmatpush1.msra.mxu0 %v295
  %1323 = vmatprep.subr.mxu0 %v299
  %1324 = vmatpush1.msra.mxu0 %v298
  %1325 = vmatprep.subr.mxu0 %v302
  %1326 = vmatpush1.msra.mxu0 %v301
  %1327 = vmatprep.subr.mxu0 %v305
  %1328 = vmatpush1.msra.mxu0 %v304
  %1329 = vmatprep.subr.mxu0 %v308
  %1330 = vmatpush1.msra.mxu0 %v307
  %1331 = vmatprep.subr.mxu0 %v311
  %1332 = vmatpush1.msra.mxu0 %v310
  %1333 = vmatprep.subr.mxu0 %v314
  %1334 = vmatpush1.msra.mxu0 %v313
  %1335 = vmatprep.subr.mxu0 %v317
  %1336 = vmatpush1.msra.mxu0 %v316
  %1337 = vmatprep.subr.mxu0 %v320
  %1338 = vmatpush1.msra.mxu0 %v319
  %1339 = vmatprep.subr.mxu0 %v323
  %1340 = vmatpush1.msra.mxu0 %v322
  %1341 = vmatprep.subr.mxu0 %v326
  %1342 = vmatpush1.msra.mxu0 %v325
  %1343 = vmatprep.subr.mxu0 0.0
  %1344 = vmatpush1.msra.mxu0 0.0
  %1345 = vmatprep.subr.mxu0 0.0
  %1346 = vmatpush1.msra.mxu0 0.0
  %1347 = vmatprep.subr.mxu0 0.0
  %1348 = vmatpush1.msra.mxu0 0.0
  %1349 = vmatprep.subr.mxu0 0.0
  %1350 = vmatpush1.msra.mxu0 0.0
  %1351 = vmatprep.subr.mxu0 0.0
  %1352 = vmatpush1.msra.mxu0 0.0
  %1353 = vmatprep.subr.mxu0 0.0
  %1354 = vmatpush1.msra.mxu0 0.0
  %1355 = vmatprep.subr.mxu0 0.0
  %1356 = vmatpush1.msra.mxu0 0.0
  %1357 = vmatprep.subr.mxu0 0.0
  %1358 = vmatpush1.msra.mxu0 0.0
  %1359 = vmatprep.subr.mxu0 0.0
  %1360 = vmatpush1.msra.mxu0 0.0
  %1361 = vmatprep.subr.mxu0 0.0
  %1362 = vmatpush1.msra.mxu0 0.0
  %1363 = vmatprep.subr.mxu0 0.0
  %1364 = vmatpush1.msra.mxu0 0.0
  %1365 = vmatprep.subr.mxu0 0.0
  %1366 = vmatpush1.msra.mxu0 0.0
  %1367 = vmatprep.subr.mxu0 0.0
  %1368 = vmatpush1.msra.mxu0 0.0
  %1369 = vmatprep.subr.mxu0 0.0
  %1370 = vmatpush1.msra.mxu0 0.0
  %1371 = vmatprep.subr.mxu0 0.0
  %1372 = vmatpush1.msra.mxu0 0.0
  %1373 = vmatprep.subr.mxu0 0.0
  %1374 = vmatpush1.msra.mxu0 0.0
  %1375 = vmatprep.mubr.f32.mxu0 0.0
  %1376 = vmatmul.mubr.f32.gmra.mrb[0].mxu0 %v1310
  %v1377 = vpop.f32.mrb[0].mxu0
  %v1378 = vadd.f32 0.0, %v1377
  %v1379 = vpop.f32.mrb[0].mxu0
  %v1380 = vadd.f32 0.0, %v1379
  %1381 = vdwg.mxu0
  %1382 = vmatprep.subr.mxu0 0.0
  %1383 = vmatpush1.msra.mxu0 %v282
  %1384 = vmatprep.subr.mxu0 0.0
  %1385 = vmatpush1.msra.mxu0 %v285
  %1386 = vmatprep.subr.mxu0 0.0
  %1387 = vmatpush1.msra.mxu0 %v288
  %1388 = vmatprep.subr.mxu0 0.0
  %1389 = vmatpush1.msra.mxu0 %v291
  %1390 = vmatprep.subr.mxu0 0.0
  %1391 = vmatpush1.msra.mxu0 %v294
  %1392 = vmatprep.subr.mxu0 0.0
  %1393 = vmatpush1.msra.mxu0 %v297
  %1394 = vmatprep.subr.mxu0 0.0
  %1395 = vmatpush1.msra.mxu0 %v300
  %1396 = vmatprep.subr.mxu0 0.0
  %1397 = vmatpush1.msra.mxu0 %v303
  %1398 = vmatprep.subr.mxu0 0.0
  %1399 = vmatpush1.msra.mxu0 %v306
  %1400 = vmatprep.subr.mxu0 0.0
  %1401 = vmatpush1.msra.mxu0 %v309
  %1402 = vmatprep.subr.mxu0 0.0
  %1403 = vmatpush1.msra.mxu0 %v312
  %1404 = vmatprep.subr.mxu0 0.0
  %1405 = vmatpush1.msra.mxu0 %v315
  %1406 = vmatprep.subr.mxu0 0.0
  %1407 = vmatpush1.msra.mxu0 %v318
  %1408 = vmatprep.subr.mxu0 0.0
  %1409 = vmatpush1.msra.mxu0 %v321
  %1410 = vmatprep.subr.mxu0 0.0
  %1411 = vmatpush1.msra.mxu0 %v324
  %1412 = vmatprep.subr.mxu0 0.0
  %1413 = vmatpush1.msra.mxu0 %v327
  %1414 = vmatprep.subr.mxu0 0.0
  %1415 = vmatpush1.msra.mxu0 0.0
  %1416 = vmatprep.subr.mxu0 0.0
  %1417 = vmatpush1.msra.mxu0 0.0
  %1418 = vmatprep.subr.mxu0 0.0
  %1419 = vmatpush1.msra.mxu0 0.0
  %1420 = vmatprep.subr.mxu0 0.0
  %1421 = vmatpush1.msra.mxu0 0.0
  %1422 = vmatprep.subr.mxu0 0.0
  %1423 = vmatpush1.msra.mxu0 0.0
  %1424 = vmatprep.subr.mxu0 0.0
  %1425 = vmatpush1.msra.mxu0 0.0
  %1426 = vmatprep.subr.mxu0 0.0
  %1427 = vmatpush1.msra.mxu0 0.0
  %1428 = vmatprep.subr.mxu0 0.0
  %1429 = vmatpush1.msra.mxu0 0.0
  %1430 = vmatprep.subr.mxu0 0.0
  %1431 = vmatpush1.msra.mxu0 0.0
  %1432 = vmatprep.subr.mxu0 0.0
  %1433 = vmatpush1.msra.mxu0 0.0
  %1434 = vmatprep.subr.mxu0 0.0
  %1435 = vmatpush1.msra.mxu0 0.0
  %1436 = vmatprep.subr.mxu0 0.0
  %1437 = vmatpush1.msra.mxu0 0.0
  %1438 = vmatprep.subr.mxu0 0.0
  %1439 = vmatpush1.msra.mxu0 0.0
  %1440 = vmatprep.subr.mxu0 0.0
  %1441 = vmatpush1.msra.mxu0 0.0
  %1442 = vmatprep.subr.mxu0 0.0
  %1443 = vmatpush1.msra.mxu0 0.0
  %1444 = vmatprep.subr.mxu0 0.0
  %1445 = vmatpush1.msra.mxu0 0.0
  %1446 = vmatprep.mubr.f32.mxu0 0.0
  %1447 = vmatmul.mubr.f32.gmra.mrb[0].mxu0 %v1310
  %v1448 = vpop.f32.mrb[0].mxu0
  %v1449 = vadd.f32 0.0, %v1448
  %v1450 = vpop.f32.mrb[0].mxu0
  %1451 = vdwg.mxu0
  %v1452 = vadd.f32 %v165, %v1378
  %v1453 = vxor.u32 %v1452, 2147483648
  %v1454 = vmul.f32 %v1453, 1.442695
  %v1455 = vpow.pop %v1454
  %v1456 = vadd.f32 %v1455, 1.0
  %v1457 = vrcp.pop %v1456
  %v1458 = vmul.f32 1.0, %v1457
  %v1459 = vadd.f32 %v167, %v1380
  %v1460 = vxor.u32 %v1459, 2147483648
  %v1461 = vmul.f32 %v1460, 1.442695
  %v1462 = vpow.pop %v1461
  %v1463 = vadd.f32 %v1462, 1.0
  %v1464 = vrcp.pop %v1463
  %v1465 = vmul.f32 1.0, %v1464
  %v1466 = vadd.f32 %v1449, %v487
  %v1467 = vmul.f32 %v1458, %v1466
  %v1468 = vadd.f32 %v272, %v1467
  %v1469 = vtanh.pop %v1468
  %v1470 = vsub.f32 1.0, %v1465
  %v1471 = vmul.f32 %v1470, %v1469
  %v1472 = vmul.f32 %v1465, %v1310
  %v1473 = vadd.f32 %v1471, %v1472
  %1474 = vmatprep.subr.mxu0 %v281
  %1475 = vmatpush1.msra.mxu0 %v280
  %1476 = vmatprep.subr.mxu0 %v284
  %1477 = vmatpush1.msra.mxu0 %v283
  %1478 = vmatprep.subr.mxu0 %v287
  %1479 = vmatpush1.msra.mxu0 %v286
  %1480 = vmatprep.subr.mxu0 %v290
  %1481 = vmatpush1.msra.mxu0 %v289
  %1482 = vmatprep.subr.mxu0 %v293
  %1483 = vmatpush1.msra.mxu0 %v292
  %1484 = vmatprep.subr.mxu0 %v296
  %1485 = vmatpush1.msra.mxu0 %v295
  %1486 = vmatprep.subr.mxu0 %v299
  %1487 = vmatpush1.msra.mxu0 %v298
  %1488 = vmatprep.subr.mxu0 %v302
  %1489 = vmatpush1.msra.mxu0 %v301
  %1490 = vmatprep.subr.mxu0 %v305
  %1491 = vmatpush1.msra.mxu0 %v304
  %1492 = vmatprep.subr.mxu0 %v308
  %1493 = vmatpush1.msra.mxu0 %v307
  %1494 = vmatprep.subr.mxu0 %v311
  %1495 = vmatpush1.msra.mxu0 %v310
  %1496 = vmatprep.subr.mxu0 %v314
  %1497 = vmatpush1.msra.mxu0 %v313
  %1498 = vmatprep.subr.mxu0 %v317
  %1499 = vmatpush1.msra.mxu0 %v316
  %1500 = vmatprep.subr.mxu0 %v320
  %1501 = vmatpush1.msra.mxu0 %v319
  %1502 = vmatprep.subr.mxu0 %v323
  %1503 = vmatpush1.msra.mxu0 %v322
  %1504 = vmatprep.subr.mxu0 %v326
  %1505 = vmatpush1.msra.mxu0 %v325
  %1506 = vmatprep.subr.mxu0 0.0
  %1507 = vmatpush1.msra.mxu0 0.0
  %1508 = vmatprep.subr.mxu0 0.0
  %1509 = vmatpush1.msra.mxu0 0.0
  %1510 = vmatprep.subr.mxu0 0.0
  %1511 = vmatpush1.msra.mxu0 0.0
  %1512 = vmatprep.subr.mxu0 0.0
  %1513 = vmatpush1.msra.mxu0 0.0
  %1514 = vmatprep.subr.mxu0 0.0
  %1515 = vmatpush1.msra.mxu0 0.0
  %1516 = vmatprep.subr.mxu0 0.0
  %1517 = vmatpush1.msra.mxu0 0.0
  %1518 = vmatprep.subr.mxu0 0.0
  %1519 = vmatpush1.msra.mxu0 0.0
  %1520 = vmatprep.subr.mxu0 0.0
  %1521 = vmatpush1.msra.mxu0 0.0
  %1522 = vmatprep.subr.mxu0 0.0
  %1523 = vmatpush1.msra.mxu0 0.0
  %1524 = vmatprep.subr.mxu0 0.0
  %1525 = vmatpush1.msra.mxu0 0.0
  %1526 = vmatprep.subr.mxu0 0.0
  %1527 = vmatpush1.msra.mxu0 0.0
  %1528 = vmatprep.subr.mxu0 0.0
  %1529 = vmatpush1.msra.mxu0 0.0
  %1530 = vmatprep.subr.mxu0 0.0
  %1531 = vmatpush1.msra.mxu0 0.0
  %1532 = vmatprep.subr.mxu0 0.0
  %1533 = vmatpush1.msra.mxu0 0.0
  %1534 = vmatprep.subr.mxu0 0.0
  %1535 = vmatpush1.msra.mxu0 0.0
  %1536 = vmatprep.subr.mxu0 0.0
  %1537 = vmatpush1.msra.mxu0 0.0
  %1538 = vmatprep.mubr.f32.mxu0 0.0
  %1539 = vmatmul.mubr.f32.gmra.mrb[0].mxu0 %v1473
  %v1540 = vpop.f32.mrb[0].mxu0
  %v1541 = vadd.f32 0.0, %v1540
  %v1542 = vpop.f32.mrb[0].mxu0
  %v1543 = vadd.f32 0.0, %v1542
  %1544 = vdwg.mxu0
  %1545 = vmatprep.subr.mxu0 0.0
  %1546 = vmatpush1.msra.mxu0 %v282
  %1547 = vmatprep.subr.mxu0 0.0
  %1548 = vmatpush1.msra.mxu0 %v285
  %1549 = vmatprep.subr.mxu0 0.0
  %1550 = vmatpush1.msra.mxu0 %v288
  %1551 = vmatprep.subr.mxu0 0.0
  %1552 = vmatpush1.msra.mxu0 %v291
  %1553 = vmatprep.subr.mxu0 0.0
  %1554 = vmatpush1.msra.mxu0 %v294
  %1555 = vmatprep.subr.mxu0 0.0
  %1556 = vmatpush1.msra.mxu0 %v297
  %1557 = vmatprep.subr.mxu0 0.0
  %1558 = vmatpush1.msra.mxu0 %v300
  %1559 = vmatprep.subr.mxu0 0.0
  %1560 = vmatpush1.msra.mxu0 %v303
  %1561 = vmatprep.subr.mxu0 0.0
  %1562 = vmatpush1.msra.mxu0 %v306
  %1563 = vmatprep.subr.mxu0 0.0
  %1564 = vmatpush1.msra.mxu0 %v309
  %1565 = vmatprep.subr.mxu0 0.0
  %1566 = vmatpush1.msra.mxu0 %v312
  %1567 = vmatprep.subr.mxu0 0.0
  %1568 = vmatpush1.msra.mxu0 %v315
  %1569 = vmatprep.subr.mxu0 0.0
  %1570 = vmatpush1.msra.mxu0 %v318
  %1571 = vmatprep.subr.mxu0 0.0
  %1572 = vmatpush1.msra.mxu0 %v321
  %1573 = vmatprep.subr.mxu0 0.0
  %1574 = vmatpush1.msra.mxu0 %v324
  %1575 = vmatprep.subr.mxu0 0.0
  %1576 = vmatpush1.msra.mxu0 %v327
  %1577 = vmatprep.subr.mxu0 0.0
  %1578 = vmatpush1.msra.mxu0 0.0
  %1579 = vmatprep.subr.mxu0 0.0
  %1580 = vmatpush1.msra.mxu0 0.0
  %1581 = vmatprep.subr.mxu0 0.0
  %1582 = vmatpush1.msra.mxu0 0.0
  %1583 = vmatprep.subr.mxu0 0.0
  %1584 = vmatpush1.msra.mxu0 0.0
  %1585 = vmatprep.subr.mxu0 0.0
  %1586 = vmatpush1.msra.mxu0 0.0
  %1587 = vmatprep.subr.mxu0 0.0
  %1588 = vmatpush1.msra.mxu0 0.0
  %1589 = vmatprep.subr.mxu0 0.0
  %1590 = vmatpush1.msra.mxu0 0.0
  %1591 = vmatprep.subr.mxu0 0.0
  %1592 = vmatpush1.msra.mxu0 0.0
  %1593 = vmatprep.subr.mxu0 0.0
  %1594 = vmatpush1.msra.mxu0 0.0
  %1595 = vmatprep.subr.mxu0 0.0
  %1596 = vmatpush1.msra.mxu0 0.0
  %1597 = vmatprep.subr.mxu0 0.0
  %1598 = vmatpush1.msra.mxu0 0.0
  %1599 = vmatprep.subr.mxu0 0.0
  %1600 = vmatpush1.msra.mxu0 0.0
  %1601 = vmatprep.subr.mxu0 0.0
  %1602 = vmatpush1.msra.mxu0 0.0
  %1603 = vmatprep.subr.mxu0 0.0
  %1604 = vmatpush1.msra.mxu0 0.0
  %1605 = vmatprep.subr.mxu0 0.0
  %1606 = vmatpush1.msra.mxu0 0.0
  %1607 = vmatprep.subr.mxu0 0.0
  %1608 = vmatpush1.msra.mxu0 0.0
  %1609 = vmatprep.mubr.f32.mxu0 0.0
  %1610 = vmatmul.mubr.f32.gmra.mrb[0].mxu0 %v1473
  %v1611 = vpop.f32.mrb[0].mxu0
  %v1612 = vadd.f32 0.0, %v1611
  %v1613 = vpop.f32.mrb[0].mxu0
  %1614 = vdwg.mxu0
  %v1615 = vadd.f32 %v171, %v1541
  %v1616 = vxor.u32 %v1615, 2147483648
  %v1617 = vmul.f32 %v1616, 1.442695
  %v1618 = vpow.pop %v1617
  %v1619 = vadd.f32 %v1618, 1.0
  %v1620 = vrcp.pop %v1619
  %v1621 = vmul.f32 1.0, %v1620
  %v1622 = vadd.f32 %v173, %v1543
  %v1623 = vxor.u32 %v1622, 2147483648
  %v1624 = vmul.f32 %v1623, 1.442695
  %v1625 = vpow.pop %v1624
  %v1626 = vadd.f32 %v1625, 1.0
  %v1627 = vrcp.pop %v1626
  %v1628 = vmul.f32 1.0, %v1627
  %v1629 = vadd.f32 %v1612, %v487
  %v1630 = vmul.f32 %v1621, %v1629
  %v1631 = vadd.f32 %v277, %v1630
  %v1632 = vtanh.pop %v1631
  %v1633 = vsub.f32 1.0, %v1628
  %v1634 = vmul.f32 %v1633, %v1632
  %v1635 = vmul.f32 %v1628, %v1473
  %v1636 = vadd.f32 %v1634, %v1635
  %v1637 = vld [vmem:[%s3] sm:$0xff]
  %v1638 = vld [vmem:[%s3 + $0x8] sm:$0xff]
  %v1639 = vld [vmem:[%s3 + $0x10] sm:$0xff]
  %v1640 = vld [vmem:[%s3 + $0x18] sm:$0xff]
  %v1641 = vld [vmem:[%s3 + $0x20] sm:$0xff]
  %v1642 = vld [vmem:[%s3 + $0x28] sm:$0xff]
  %v1643 = vld [vmem:[%s3 + $0x30] sm:$0xff]
  %v1644 = vld [vmem:[%s3 + $0x38] sm:$0xff]
  %v1645 = vld [vmem:[%s3 + $0x40] sm:$0xff]
  %v1646 = vld [vmem:[%s3 + $0x48] sm:$0xff]
  %v1647 = vld [vmem:[%s3 + $0x50] sm:$0xff]
  %v1648 = vld [vmem:[%s3 + $0x58] sm:$0xff]
  %v1649 = vld [vmem:[%s3 + $0x60] sm:$0xff]
  %v1650 = vld [vmem:[%s3 + $0x68] sm:$0xff]
  %v1651 = vld [vmem:[%s3 + $0x70] sm:$0xff]
  %v1652 = vld [vmem:[%s3 + $0x78] sm:$0xff]
  %v1653 = vld [vmem:[%s3 + $0x81] sm:$0x1]
  %v1654 = vlaneseq
  %v1655 = vshrl.u32 %v1654, 7
  %v1656 = vsub.s32 0, %v1655
  %v1657 = vrot.slane %v1653, %v1656
  %1658 = vmatprep.subr.mxu0 0.0
  %1659 = vmatpush1.msra.mxu0 %v1637
  %1660 = vmatprep.subr.mxu0 0.0
  %1661 = vmatpush1.msra.mxu0 %v1638
  %1662 = vmatprep.subr.mxu0 0.0
  %1663 = vmatpush1.msra.mxu0 %v1639
  %1664 = vmatprep.subr.mxu0 0.0
  %1665 = vmatpush1.msra.mxu0 %v1640
  %1666 = vmatprep.subr.mxu0 0.0
  %1667 = vmatpush1.msra.mxu0 %v1641
  %1668 = vmatprep.subr.mxu0 0.0
  %1669 = vmatpush1.msra.mxu0 %v1642
  %1670 = vmatprep.subr.mxu0 0.0
  %1671 = vmatpush1.msra.mxu0 %v1643
  %1672 = vmatprep.subr.mxu0 0.0
  %1673 = vmatpush1.msra.mxu0 %v1644
  %1674 = vmatprep.subr.mxu0 0.0
  %1675 = vmatpush1.msra.mxu0 %v1645
  %1676 = vmatprep.subr.mxu0 0.0
  %1677 = vmatpush1.msra.mxu0 %v1646
  %1678 = vmatprep.subr.mxu0 0.0
  %1679 = vmatpush1.msra.mxu0 %v1647
  %1680 = vmatprep.subr.mxu0 0.0
  %1681 = vmatpush1.msra.mxu0 %v1648
  %1682 = vmatprep.subr.mxu0 0.0
  %1683 = vmatpush1.msra.mxu0 %v1649
  %1684 = vmatprep.subr.mxu0 0.0
  %1685 = vmatpush1.msra.mxu0 %v1650
  %1686 = vmatprep.subr.mxu0 0.0
  %1687 = vmatpush1.msra.mxu0 %v1651
  %1688 = vmatprep.subr.mxu0 0.0
  %1689 = vmatpush1.msra.mxu0 %v1652
  %1690 = vmatprep.subr.mxu0 0.0
  %1691 = vmatpush1.msra.mxu0 0.0
  %1692 = vmatprep.subr.mxu0 0.0
  %1693 = vmatpush1.msra.mxu0 0.0
  %1694 = vmatprep.subr.mxu0 0.0
  %1695 = vmatpush1.msra.mxu0 0.0
  %1696 = vmatprep.subr.mxu0 0.0
  %1697 = vmatpush1.msra.mxu0 0.0
  %1698 = vmatprep.subr.mxu0 0.0
  %1699 = vmatpush1.msra.mxu0 0.0
  %1700 = vmatprep.subr.mxu0 0.0
  %1701 = vmatpush1.msra.mxu0 0.0
  %1702 = vmatprep.subr.mxu0 0.0
  %1703 = vmatpush1.msra.mxu0 0.0
  %1704 = vmatprep.subr.mxu0 0.0
  %1705 = vmatpush1.msra.mxu0 0.0
  %1706 = vmatprep.subr.mxu0 0.0
  %1707 = vmatpush1.msra.mxu0 0.0
  %1708 = vmatprep.subr.mxu0 0.0
  %1709 = vmatpush1.msra.mxu0 0.0
  %1710 = vmatprep.subr.mxu0 0.0
  %1711 = vmatpush1.msra.mxu0 0.0
  %1712 = vmatprep.subr.mxu0 0.0
  %1713 = vmatpush1.msra.mxu0 0.0
  %1714 = vmatprep.subr.mxu0 0.0
  %1715 = vmatpush1.msra.mxu0 0.0
  %1716 = vmatprep.subr.mxu0 0.0
  %1717 = vmatpush1.msra.mxu0 0.0
  %1718 = vmatprep.subr.mxu0 0.0
  %1719 = vmatpush1.msra.mxu0 0.0
  %1720 = vmatprep.subr.mxu0 0.0
  %1721 = vmatpush1.msra.mxu0 0.0
  %1722 = vmatprep.mubr.f32.mxu0 0.0
  %1723 = vmatmul.mubr.f32.gmra.mrb[0].mxu0 %v1636
  %v1724 = vpop.f32.mrb[0].mxu0
  %v1725 = vadd.f32 %v1657, %v1724
  %v1726 = vpop.f32.mrb[0].mxu0
  %1727 = vdwg.mxu0
  %1728 = vst [vmem:[%s4] sm:$0xff] %v1725
  // Predicated region
  $region18: #{recognition_rnn_forward.1} parent=0 // pred_check
    _
  $region19: #{recognition_rnn_forward.1} parent=0 // pred_check_branch
    %1730 = sbr.rel (0) target = $region21
  $region20: #{recognition_rnn_forward.1} parent=0 // pred_region
    _
  $region21: #{recognition_rnn_forward.1} parent=0 // pred_fallthru
    _
  // Predicated region
  $region22: #{recognition_rnn_forward.1} parent=0 // pred_check
    _
  $region23: #{recognition_rnn_forward.1} parent=0 // pred_check_branch
    %1732 = sbr.rel (0) target = $region25
  $region24: #{recognition_rnn_forward.1} parent=0 // pred_region
    _
  $region25: #{recognition_rnn_forward.1} parent=0 // pred_fallthru
    _

</llo_original>
